<compile_context>
chip_gen: v6e
topology: v6e:2x2x1
jax: 0.10.0
libtpu: 0.0.40
codegen_flags: <defaults>
</compile_context>

<pallas_src>
import math
from functools import partial

import jax
import jax.numpy as jnp
from jax.experimental import pallas as pl
from jax.experimental.pallas import tpu as pltpu


# ------------------------------- helpers ------------------------------------

def _round_up(x, m):
    return ((x + m - 1) // m) * m


def _pick_q_tile(s, cap=512):
    """Largest divisor of s that is a multiple of 8 and <= cap (else s)."""
    if s <= cap:
        return s
    for t in range(cap, 7, -8):
        if s % t == 0:
            return t
    return s


def _vmem_limit(block_bytes):
    # double-buffered pipeline blocks + temporaries headroom, clamped to what
    # every TPU generation can actually provide (v7x has 64 MiB per core).
    est = 5 * int(block_bytes) + (4 << 20)
    return int(max(16 << 20, min(est, 64 << 20)))


# --------------------- fused attention + residual + LN ----------------------

def _attn_block_kernel(x_ref, kv_ref, wq_ref, bq_ref, wkv_ref, bkv_ref,
                       wo_ref, bo_ref, g_ref, b_ref, o_ref,
                       *, num_heads, eps):
    E = x_ref.shape[-1]
    hd = E // num_heads
    scale = 1.0 / math.sqrt(hd)

    x = x_ref[0]                                    # (tq, E) f32 (query + residual)
    kv = kv_ref[0]                                  # (T,  E) f32 (key/value source)

    # Q projection (PyTorch q-scaling folded in) + fused K|V projection.
    q = (jnp.dot(x.astype(jnp.bfloat16), wq_ref[...],
                 preferred_element_type=jnp.float32) + bq_ref[...]) * scale
    kvp = jnp.dot(kv.astype(jnp.bfloat16), wkv_ref[...],
                  preferred_element_type=jnp.float32) + bkv_ref[...]

    # bf16 operands for every MXU matmul; f32 accumulation / stats.
    q16 = q.astype(jnp.bfloat16)
    k16 = kvp[:, :E].astype(jnp.bfloat16)
    v16 = kvp[:, E:].astype(jnp.bfloat16)
    wo = wo_ref[...]

    # Per-head attention accumulated straight into the out-projection
    # (no per-head concat; MXU sees a full-width E output dimension).
    o = jnp.zeros((x.shape[0], E), jnp.float32)
    for h in range(num_heads):                      # static unroll over heads
        sl = slice(h * hd, (h + 1) * hd)
        s = jax.lax.dot_general(q16[:, sl], k16[:, sl],
                                (((1,), (1,)), ((), ())),
                                preferred_element_type=jnp.float32)     # (tq, T)
        m = jnp.max(s, axis=-1, keepdims=True)
        p = jnp.exp(s - m)
        p = p * pl.reciprocal(jnp.sum(p, axis=-1, keepdims=True), approx=True)
        ph = jnp.dot(p.astype(jnp.bfloat16), v16[:, sl],
                     preferred_element_type=jnp.float32)                # (tq, hd)
        o = o + jnp.dot(ph.astype(jnp.bfloat16), wo[sl, :],
                        preferred_element_type=jnp.float32)             # (tq, E)

    y = x + o + bo_ref[...]                          # residual + out-proj bias
    mu = jnp.mean(y, axis=-1, keepdims=True)
    var = jnp.mean(jnp.square(y - mu), axis=-1, keepdims=True)
    o_ref[0] = ((y - mu) * jax.lax.rsqrt(var + eps)
                * g_ref[...] + b_ref[...]).astype(o_ref.dtype)


def attn_block(x_bse, kv_bse, p, ln_g, ln_b, num_heads):
    """LayerNorm(x + MHA(x, kv, kv)); grid over (batch, query tiles)."""
    B, S, E = x_bse.shape
    T = kv_bse.shape[1]
    tq = _pick_q_tile(S)
    n_q = S // tq

    # TODO(synk): for very large T the K/V projection is recomputed per query
    # tile; hoist it to a separate pass if that ever dominates.
    blk = 4 * (tq * E + T * E + tq * E)            # x, kv, out  (f32)
    blk += 2 * (E * E + 2 * E * E + E * E)         # wq, wkv, wo (bf16)
    blk += 4 * 6 * E                               # biases + LN params

    return pl.pallas_call(
        partial(_attn_block_kernel, num_heads=num_heads, eps=1e-5),
        out_shape=jax.ShapeDtypeStruct((B, S, E), jnp.float32),
        grid=(B, n_q),
        in_specs=[
            pl.BlockSpec((1, tq, E), lambda b, q: (b, q, 0)),    # x (queries)
            pl.BlockSpec((1, T, E), lambda b, q: (b, 0, 0)),     # kv source
            pl.BlockSpec((E, E), lambda b, q: (0, 0)),           # wq  (bf16)
            pl.BlockSpec((1, E), lambda b, q: (0, 0)),           # bq
            pl.BlockSpec((E, 2 * E), lambda b, q: (0, 0)),       # wkv (bf16)
            pl.BlockSpec((1, 2 * E), lambda b, q: (0, 0)),       # bkv
            pl.BlockSpec((E, E), lambda b, q: (0, 0)),           # wo  (bf16)
            pl.BlockSpec((1, E), lambda b, q: (0, 0)),           # bo
            pl.BlockSpec((1, E), lambda b, q: (0, 0)),           # ln gamma
            pl.BlockSpec((1, E), lambda b, q: (0, 0)),           # ln beta
        ],
        out_specs=pl.BlockSpec((1, tq, E), lambda b, q: (b, q, 0)),
        compiler_params=pltpu.CompilerParams(
            dimension_semantics=("parallel", "parallel"),
            vmem_limit_bytes=_vmem_limit(blk)),
    )(x_bse, kv_bse, p["wq"], p["bq"], p["wkv"], p["bkv"],
      p["wo"], p["bo"], ln_g, ln_b)


# ------------ fused MoE (gate + top-k + streamed experts) + LN --------------

def _moe_block_kernel(x_ref, gw_ref, gb_ref, ew_ref, eb_ref, g_ref, b_ref,
                      o_ref, acc_ref, *, top_k, eps):
    e = pl.program_id(1)
    ne = pl.num_programs(1)

    x = x_ref[...]                                   # (tm, E) f32
    x16 = x.astype(jnp.bfloat16)

    @pl.when(e == 0)
    def _():
        acc_ref[...] = jnp.zeros_like(acc_ref)

    # Gate logits only -- softmax dropped: it is monotonic and the expert sum
    # is unweighted, so ranking by logits gives the identical top-k mask.
    logits = jnp.dot(x16, gw_ref[...],
                     preferred_element_type=jnp.float32) + gb_ref[...]   # (tm, NE)
    lane = jax.lax.broadcasted_iota(jnp.int32, logits.shape, 1)
    logit_e = jnp.sum(jnp.where(lane == e, logits, 0.0),
                      axis=-1, keepdims=True)                            # (tm, 1)
    # expert e is selected iff fewer than top_k experts beat it
    # (strictly greater, or equal with a lower index -> torch.topk tie order).
    beats = jnp.logical_or(logits > logit_e,
                           jnp.logical_and(logits == logit_e, lane < e))
    rank = jnp.sum(beats.astype(jnp.int32), axis=-1, keepdims=True)
    mask_e = (rank < top_k).astype(jnp.float32)                          # (tm, 1)

    ye = jnp.dot(x16, ew_ref[0], preferred_element_type=jnp.float32) + eb_ref[0]
    acc_ref[...] += mask_e * ye

    @pl.when(e == ne - 1)
    def _():
        y = x + acc_ref[...]                         # residual
        mu = jnp.mean(y, axis=-1, keepdims=True)
        var = jnp.mean(jnp.square(y - mu), axis=-1, keepdims=True)
        o_ref[...] = ((y - mu) * jax.lax.rsqrt(var + eps)
                      * g_ref[...] + b_ref[...]).astype(o_ref.dtype)


def moe_ln_block(x2d, p, ln_g, ln_b, top_k):
    """LayerNorm(x + MoE(x)); grid = (token tiles, streamed experts)."""
    M, E = x2d.shape
    NE = p["expert_w"].shape[0]

    tm = 256 if M >= 256 else _round_up(M, 8)
    M_pad = _round_up(M, tm)
    x_in = x2d if M_pad == M else jnp.pad(x2d, ((0, M_pad - M), (0, 0)))

    blk = 4 * (3 * tm * E)                      # x, out, acc scratch (f32)
    blk += 2 * (E * NE + E * E)                 # gate_w + ONE streamed expert_w
    blk += 4 * (NE + 3 * E)                     # gate_b, expert_b, ln params

    out = pl.pallas_call(
        partial(_moe_block_kernel, top_k=top_k, eps=1e-5),
        out_shape=jax.ShapeDtypeStruct((M_pad, E), jnp.float32),
        grid=(M_pad // tm, NE),
        in_specs=[
            pl.BlockSpec((tm, E), lambda i, e: (i, 0)),          # x tile (resident over e)
            pl.BlockSpec((E, NE), lambda i, e: (0, 0)),          # gate_w (bf16)
            pl.BlockSpec((1, NE), lambda i, e: (0, 0)),          # gate_b
            pl.BlockSpec((1, E, E), lambda i, e: (e, 0, 0)),     # expert_w[e] (streamed)
            pl.BlockSpec((1, 1, E), lambda i, e: (e, 0, 0)),     # expert_b[e]
            pl.BlockSpec((1, E), lambda i, e: (0, 0)),           # ln gamma
            pl.BlockSpec((1, E), lambda i, e: (0, 0)),           # ln beta
        ],
        out_specs=pl.BlockSpec((tm, E), lambda i, e: (i, 0)),
        scratch_shapes=[pltpu.VMEM((tm, E), jnp.float32)],
        compiler_params=pltpu.CompilerParams(
            dimension_semantics=("parallel", "arbitrary"),
            vmem_limit_bytes=_vmem_limit(blk)),
    )(x_in, p["gate_w"], p["gate_b"], p["expert_w"], p["expert_b"], ln_g, ln_b)
    return out[:M] if M_pad != M else out


# ------------------------ fused mean-pool + out head ------------------------

def _pool_head_kernel(x_ref, w_ref, b_ref, o_ref, *, seq_len):
    pooled = jnp.sum(x_ref[0], axis=0, keepdims=True) * (1.0 / seq_len)  # (1, E)
    out = jax.lax.dot_general(pooled.astype(jnp.bfloat16), w_ref[...],
                              (((1,), (1,)), ((), ())),
                              preferred_element_type=jnp.float32) + b_ref[...]
    o_ref[0] = out.astype(o_ref.dtype)


def pool_head(x_bse, w, b):
    B, S, E = x_bse.shape
    N = w.shape[0]                                   # w stored as (N, E) bf16
    out = pl.pallas_call(
        partial(_pool_head_kernel, seq_len=S),
        out_shape=jax.ShapeDtypeStruct((B, 1, N), jnp.float32),
        grid=(B,),
        in_specs=[pl.BlockSpec((1, S, E), lambda bb: (bb, 0, 0)),
                  pl.BlockSpec((N, E), lambda bb: (0, 0)),
                  pl.BlockSpec((1, N), lambda bb: (0, 0))],
        out_specs=pl.BlockSpec((1, 1, N), lambda bb: (bb, 0, 0)),
        compiler_params=pltpu.CompilerParams(dimension_semantics=("parallel",)),
    )(x_bse, w, b)
    return out.reshape(B, N)


# ------------------------------- model glue ---------------------------------

def sinusoidal_pe(seq_len, embed, dtype):
    # TODO(synk): PositionalEncoding class is not provided in the source module;
    # using the standard added sinusoidal PE (no dropout).
    pos = jnp.arange(seq_len, dtype=jnp.float32)[:, None]
    div = jnp.exp(jnp.arange(0, embed, 2, dtype=jnp.float32)
                  * (-math.log(10000.0) / embed))
    pe = jnp.zeros((seq_len, embed), jnp.float32)
    pe = pe.at[:, 0::2].set(jnp.sin(pos * div))
    pe = pe.at[:, 1::2].set(jnp.cos(pos * div)[:, :embed // 2])
    return pe.astype(dtype)


def decoder_layer(x_bse, enc_bse, p, num_heads, top_k):
    # dropout -> identity (inference mode)
    x = attn_block(x_bse, x_bse, p["self_attn"], p["ln1_g"], p["ln1_b"], num_heads)
    x = attn_block(x, enc_bse, p["cross_attn"], p["ln2_g"], p["ln2_b"], num_heads)
    B, S, E = x.shape
    y2d = moe_ln_block(x.reshape(B * S, E), p["moe"], p["ln3_g"], p["ln3_b"], top_k)
    return y2d.reshape(B, S, E)


def esm_decoder_full_moe(token_ids, encoder_output, params, num_heads, top_k):
    emb = jnp.take(params["embedding"], token_ids, axis=0)   # (B, S, E)
    B, S, E = emb.shape
    x = emb + sinusoidal_pe(S, E, emb.dtype)[None]
    for lp in params["layers"]:
        x = decoder_layer(x, encoder_output, lp, num_heads, top_k)
    return pool_head(x, params["out_w"], params["out_b"])    # (B, 1)


# ------------------------------ init / main ---------------------------------

def init_params(key, vocab_size, num_layers, embed, num_experts):
    def nrm(k, shape, scale=0.02, dtype=jnp.bfloat16):
        return (scale * jax.random.normal(k, shape, jnp.float32)).astype(dtype)

    keys = jax.random.split(key, 3 + num_layers)

    def attn_params(k):
        ks = jax.random.split(k, 3)
        return {"wq": nrm(ks[0], (embed, embed)),
                "bq": jnp.zeros((1, embed), jnp.float32),
                "wkv": nrm(ks[1], (embed, 2 * embed)),
                "bkv": jnp.zeros((1, 2 * embed), jnp.float32),
                "wo": nrm(ks[2], (embed, embed)),
                "bo": jnp.zeros((1, embed), jnp.float32)}

    params = {"embedding": nrm(keys[0], (vocab_size, embed), 1.0, jnp.float32),
              "out_w": nrm(keys[1], (1, embed)),           # (N, E), N = 1
              "out_b": jnp.zeros((1, 1), jnp.float32),
              "layers": []}
    for li in range(num_layers):
        ks = jax.random.split(keys[3 + li], 4)
        lp = {"self_attn": attn_params(ks[0]),
              "cross_attn": attn_params(ks[1]),
              "moe": {"gate_w": nrm(ks[2], (embed, num_experts)),
                      "gate_b": jnp.zeros((1, num_experts), jnp.float32),
                      "expert_w": nrm(ks[3], (num_experts, embed, embed)),
                      "expert_b": jnp.zeros((num_experts, 1, embed), jnp.float32)},
              "ln1_g": jnp.ones((1, embed), jnp.float32),
              "ln1_b": jnp.zeros((1, embed), jnp.float32),
              "ln2_g": jnp.ones((1, embed), jnp.float32),
              "ln2_b": jnp.zeros((1, embed), jnp.float32),
              "ln3_g": jnp.ones((1, embed), jnp.float32),
              "ln3_b": jnp.zeros((1, embed), jnp.float32)}
        params["layers"].append(lp)
    return params


if __name__ == "__main__":
    vocab_size = 50
    num_layers = 2
    embed_size = 32
    num_heads = 4
    num_experts = 4
    top_k = 2
    B, S, T = 2, 8, 8

    key = jax.random.PRNGKey(0)
    kp, kt, ke = jax.random.split(key, 3)
    params = init_params(kp, vocab_size, num_layers, embed_size, num_experts)
    token_ids = jax.random.randint(kt, (B, S), 0, vocab_size)
    encoder_output = jax.random.normal(ke, (B, T, embed_size), jnp.float32)

    forward = jax.jit(esm_decoder_full_moe, static_argnums=(3, 4))
    out = forward(token_ids, encoder_output, params, num_heads, top_k)
    out = jax.block_until_ready(out)
    assert out.shape == (B, 1), out.shape
    assert bool(jnp.all(jnp.isfinite(out)))
    print("KERNEL_OK")
</pallas_src>

<mosaic_0001>
module attributes {stable_mosaic.version = 11 : i64} {
  func.func @_attn_block_kernel(%arg0: i32, %arg1: i32, %arg2: memref<1x8x32xf32, #tpu.memory_space<vmem>>, %arg3: memref<1x8x32xf32, #tpu.memory_space<vmem>>, %arg4: memref<32x32xbf16, #tpu.memory_space<vmem>>, %arg5: memref<1x32xf32, #tpu.memory_space<vmem>>, %arg6: memref<32x64xbf16, #tpu.memory_space<vmem>>, %arg7: memref<1x64xf32, #tpu.memory_space<vmem>>, %arg8: memref<32x32xbf16, #tpu.memory_space<vmem>>, %arg9: memref<1x32xf32, #tpu.memory_space<vmem>>, %arg10: memref<1x32xf32, #tpu.memory_space<vmem>>, %arg11: memref<1x32xf32, #tpu.memory_space<vmem>>, %arg12: memref<1x8x32xf32, #tpu.memory_space<vmem>>) attributes {dimension_semantics = [#tpu.dimension_semantics<parallel>, #tpu.dimension_semantics<parallel>], iteration_bounds = array<i64: 2, 1>, scalar_prefetch = 0 : i64, scratch_operands = 0 : i64, tpu.core_type = #tpu.core_type<tc>, window_params = [{transform_indices = @transform_0, window_bounds = array<i64: 1, 8, 32>}, {transform_indices = @transform_1, window_bounds = array<i64: 1, 8, 32>}, {pipeline_mode = #tpu.pipeline_mode<synchronous>, transform_indices = @transform_2, window_bounds = array<i64: 32, 32>}, {pipeline_mode = #tpu.pipeline_mode<synchronous>, transform_indices = @transform_3, window_bounds = array<i64: 1, 32>}, {pipeline_mode = #tpu.pipeline_mode<synchronous>, transform_indices = @transform_4, window_bounds = array<i64: 32, 64>}, {pipeline_mode = #tpu.pipeline_mode<synchronous>, transform_indices = @transform_5, window_bounds = array<i64: 1, 64>}, {pipeline_mode = #tpu.pipeline_mode<synchronous>, transform_indices = @transform_6, window_bounds = array<i64: 32, 32>}, {pipeline_mode = #tpu.pipeline_mode<synchronous>, transform_indices = @transform_7, window_bounds = array<i64: 1, 32>}, {pipeline_mode = #tpu.pipeline_mode<synchronous>, transform_indices = @transform_8, window_bounds = array<i64: 1, 32>}, {pipeline_mode = #tpu.pipeline_mode<synchronous>, transform_indices = @transform_9, window_bounds = array<i64: 1, 32>}, {transform_indices = @transform_10, window_bounds = array<i64: 1, 8, 32>}]} {
    %c0 = arith.constant 0 : index
    %c0_0 = arith.constant 0 : index
    %c0_1 = arith.constant 0 : index
    %0 = vector.load %arg2[%c0, %c0_0, %c0_1] : memref<1x8x32xf32, #tpu.memory_space<vmem>>, vector<1x8x32xf32>
    %1 = vector.shape_cast %0 : vector<1x8x32xf32> to vector<8x32xf32>
    %c0_2 = arith.constant 0 : index
    %c0_3 = arith.constant 0 : index
    %c0_4 = arith.constant 0 : index
    %2 = vector.load %arg3[%c0_2, %c0_3, %c0_4] : memref<1x8x32xf32, #tpu.memory_space<vmem>>, vector<1x8x32xf32>
    %3 = vector.shape_cast %2 : vector<1x8x32xf32> to vector<8x32xf32>
    %4 = arith.truncf %1 : vector<8x32xf32> to vector<8x32xbf16>
    %c0_5 = arith.constant 0 : index
    %c0_6 = arith.constant 0 : index
    %5 = vector.load %arg4[%c0_5, %c0_6] : memref<32x32xbf16, #tpu.memory_space<vmem>>, vector<32x32xbf16>
    %cst = arith.constant dense<0.000000e+00> : vector<8x32xf32>
    %6 = tpu.matmul %4, %5, %cst {dimension_numbers = #tpu.dot_dimension_numbers<[1], [0], [0], [1], [0, 0, 1, 1], [], []>} : vector<8x32xbf16>, vector<32x32xbf16>, vector<8x32xf32> -> vector<8x32xf32>
    %c0_7 = arith.constant 0 : index
    %c0_8 = arith.constant 0 : index
    %7 = vector.load %arg5[%c0_7, %c0_8] : memref<1x32xf32, #tpu.memory_space<vmem>>, vector<1x32xf32>
    %8 = vector.broadcast %7 : vector<1x32xf32> to vector<8x32xf32>
    %9 = arith.addf %6, %8 : vector<8x32xf32>
    %cst_9 = arith.constant 0.353553385 : f32
    %10 = vector.broadcast %cst_9 : f32 to vector<8x32xf32>
    %11 = arith.mulf %9, %10 : vector<8x32xf32>
    %12 = arith.truncf %3 : vector<8x32xf32> to vector<8x32xbf16>
    %c0_10 = arith.constant 0 : index
    %c0_11 = arith.constant 0 : index
    %13 = vector.load %arg6[%c0_10, %c0_11] : memref<32x64xbf16, #tpu.memory_space<vmem>>, vector<32x64xbf16>
    %cst_12 = arith.constant dense<0.000000e+00> : vector<8x64xf32>
    %14 = tpu.matmul %12, %13, %cst_12 {dimension_numbers = #tpu.dot_dimension_numbers<[1], [0], [0], [1], [0, 0, 1, 1], [], []>} : vector<8x32xbf16>, vector<32x64xbf16>, vector<8x64xf32> -> vector<8x64xf32>
    %c0_13 = arith.constant 0 : index
    %c0_14 = arith.constant 0 : index
    %15 = vector.load %arg7[%c0_13, %c0_14] : memref<1x64xf32, #tpu.memory_space<vmem>>, vector<1x64xf32>
    %16 = vector.broadcast %15 : vector<1x64xf32> to vector<8x64xf32>
    %17 = arith.addf %14, %16 : vector<8x64xf32>
    %18 = arith.truncf %11 : vector<8x32xf32> to vector<8x32xbf16>
    %19 = vector.extract_strided_slice %17 {offsets = [0, 0], sizes = [8, 32], strides = [1, 1]} : vector<8x64xf32> to vector<8x32xf32>
    %20 = arith.truncf %19 : vector<8x32xf32> to vector<8x32xbf16>
    %21 = vector.extract_strided_slice %17 {offsets = [0, 32], sizes = [8, 32], strides = [1, 1]} : vector<8x64xf32> to vector<8x32xf32>
    %22 = arith.truncf %21 : vector<8x32xf32> to vector<8x32xbf16>
    %c0_15 = arith.constant 0 : index
    %c0_16 = arith.constant 0 : index
    %23 = vector.load %arg8[%c0_15, %c0_16] : memref<32x32xbf16, #tpu.memory_space<vmem>>, vector<32x32xbf16>
    %cst_17 = arith.constant 0.000000e+00 : f32
    %24 = vector.broadcast %cst_17 : f32 to vector<8x32xf32>
    %25 = vector.extract_strided_slice %18 {offsets = [0, 0], sizes = [8, 8], strides = [1, 1]} : vector<8x32xbf16> to vector<8x8xbf16>
    %26 = vector.extract_strided_slice %20 {offsets = [0, 0], sizes = [8, 8], strides = [1, 1]} : vector<8x32xbf16> to vector<8x8xbf16>
    %cst_18 = arith.constant dense<0.000000e+00> : vector<8x8xf32>
    %27 = tpu.matmul %25, %26, %cst_18 {dimension_numbers = #tpu.dot_dimension_numbers<[1], [1], [0], [0], [0, 0, 1, 0], [], []>} : vector<8x8xbf16>, vector<8x8xbf16>, vector<8x8xf32> -> vector<8x8xf32>
    %cst_19 = arith.constant dense<0xFF800000> : vector<8xf32>
    %28 = vector.multi_reduction <maximumf>, %27, %cst_19 [1] : vector<8x8xf32> to vector<8xf32>
    %29 = vector.shape_cast %28 : vector<8xf32> to vector<8x1xf32>
    %30 = vector.broadcast %29 : vector<8x1xf32> to vector<8x8xf32>
    %31 = arith.subf %27, %30 : vector<8x8xf32>
    %32 = math.exp %31 : vector<8x8xf32>
    %cst_20 = arith.constant dense<0.000000e+00> : vector<8xf32>
    %33 = vector.multi_reduction <add>, %32, %cst_20 [1] : vector<8x8xf32> to vector<8xf32>
    %34 = vector.shape_cast %33 : vector<8xf32> to vector<8x1xf32>
    %35 = tpu.reciprocal %34 {approx = true} : vector<8x1xf32> -> vector<8x1xf32>
    %36 = vector.broadcast %35 : vector<8x1xf32> to vector<8x8xf32>
    %37 = arith.mulf %32, %36 : vector<8x8xf32>
    %38 = arith.truncf %37 : vector<8x8xf32> to vector<8x8xbf16>
    %39 = vector.extract_strided_slice %22 {offsets = [0, 0], sizes = [8, 8], strides = [1, 1]} : vector<8x32xbf16> to vector<8x8xbf16>
    %cst_21 = arith.constant dense<0.000000e+00> : vector<8x8xf32>
    %40 = tpu.matmul %38, %39, %cst_21 {dimension_numbers = #tpu.dot_dimension_numbers<[1], [0], [0], [1], [0, 0, 1, 1], [], []>} : vector<8x8xbf16>, vector<8x8xbf16>, vector<8x8xf32> -> vector<8x8xf32>
    %41 = arith.truncf %40 : vector<8x8xf32> to vector<8x8xbf16>
    %42 = vector.extract_strided_slice %23 {offsets = [0, 0], sizes = [8, 32], strides = [1, 1]} : vector<32x32xbf16> to vector<8x32xbf16>
    %cst_22 = arith.constant dense<0.000000e+00> : vector<8x32xf32>
    %43 = tpu.matmul %41, %42, %cst_22 {dimension_numbers = #tpu.dot_dimension_numbers<[1], [0], [0], [1], [0, 0, 1, 1], [], []>} : vector<8x8xbf16>, vector<8x32xbf16>, vector<8x32xf32> -> vector<8x32xf32>
    %44 = arith.addf %24, %43 : vector<8x32xf32>
    %45 = vector.extract_strided_slice %18 {offsets = [0, 8], sizes = [8, 8], strides = [1, 1]} : vector<8x32xbf16> to vector<8x8xbf16>
    %46 = vector.extract_strided_slice %20 {offsets = [0, 8], sizes = [8, 8], strides = [1, 1]} : vector<8x32xbf16> to vector<8x8xbf16>
    %cst_23 = arith.constant dense<0.000000e+00> : vector<8x8xf32>
    %47 = tpu.matmul %45, %46, %cst_23 {dimension_numbers = #tpu.dot_dimension_numbers<[1], [1], [0], [0], [0, 0, 1, 0], [], []>} : vector<8x8xbf16>, vector<8x8xbf16>, vector<8x8xf32> -> vector<8x8xf32>
    %cst_24 = arith.constant dense<0xFF800000> : vector<8xf32>
    %48 = vector.multi_reduction <maximumf>, %47, %cst_24 [1] : vector<8x8xf32> to vector<8xf32>
    %49 = vector.shape_cast %48 : vector<8xf32> to vector<8x1xf32>
    %50 = vector.broadcast %49 : vector<8x1xf32> to vector<8x8xf32>
    %51 = arith.subf %47, %50 : vector<8x8xf32>
    %52 = math.exp %51 : vector<8x8xf32>
    %cst_25 = arith.constant dense<0.000000e+00> : vector<8xf32>
    %53 = vector.multi_reduction <add>, %52, %cst_25 [1] : vector<8x8xf32> to vector<8xf32>
    %54 = vector.shape_cast %53 : vector<8xf32> to vector<8x1xf32>
    %55 = tpu.reciprocal %54 {approx = true} : vector<8x1xf32> -> vector<8x1xf32>
    %56 = vector.broadcast %55 : vector<8x1xf32> to vector<8x8xf32>
    %57 = arith.mulf %52, %56 : vector<8x8xf32>
    %58 = arith.truncf %57 : vector<8x8xf32> to vector<8x8xbf16>
    %59 = vector.extract_strided_slice %22 {offsets = [0, 8], sizes = [8, 8], strides = [1, 1]} : vector<8x32xbf16> to vector<8x8xbf16>
    %cst_26 = arith.constant dense<0.000000e+00> : vector<8x8xf32>
    %60 = tpu.matmul %58, %59, %cst_26 {dimension_numbers = #tpu.dot_dimension_numbers<[1], [0], [0], [1], [0, 0, 1, 1], [], []>} : vector<8x8xbf16>, vector<8x8xbf16>, vector<8x8xf32> -> vector<8x8xf32>
    %61 = arith.truncf %60 : vector<8x8xf32> to vector<8x8xbf16>
    %62 = vector.extract_strided_slice %23 {offsets = [8, 0], sizes = [8, 32], strides = [1, 1]} : vector<32x32xbf16> to vector<8x32xbf16>
    %cst_27 = arith.constant dense<0.000000e+00> : vector<8x32xf32>
    %63 = tpu.matmul %61, %62, %cst_27 {dimension_numbers = #tpu.dot_dimension_numbers<[1], [0], [0], [1], [0, 0, 1, 1], [], []>} : vector<8x8xbf16>, vector<8x32xbf16>, vector<8x32xf32> -> vector<8x32xf32>
    %64 = arith.addf %44, %63 : vector<8x32xf32>
    %65 = vector.extract_strided_slice %18 {offsets = [0, 16], sizes = [8, 8], strides = [1, 1]} : vector<8x32xbf16> to vector<8x8xbf16>
    %66 = vector.extract_strided_slice %20 {offsets = [0, 16], sizes = [8, 8], strides = [1, 1]} : vector<8x32xbf16> to vector<8x8xbf16>
    %cst_28 = arith.constant dense<0.000000e+00> : vector<8x8xf32>
    %67 = tpu.matmul %65, %66, %cst_28 {dimension_numbers = #tpu.dot_dimension_numbers<[1], [1], [0], [0], [0, 0, 1, 0], [], []>} : vector<8x8xbf16>, vector<8x8xbf16>, vector<8x8xf32> -> vector<8x8xf32>
    %cst_29 = arith.constant dense<0xFF800000> : vector<8xf32>
    %68 = vector.multi_reduction <maximumf>, %67, %cst_29 [1] : vector<8x8xf32> to vector<8xf32>
    %69 = vector.shape_cast %68 : vector<8xf32> to vector<8x1xf32>
    %70 = vector.broadcast %69 : vector<8x1xf32> to vector<8x8xf32>
    %71 = arith.subf %67, %70 : vector<8x8xf32>
    %72 = math.exp %71 : vector<8x8xf32>
    %cst_30 = arith.constant dense<0.000000e+00> : vector<8xf32>
    %73 = vector.multi_reduction <add>, %72, %cst_30 [1] : vector<8x8xf32> to vector<8xf32>
    %74 = vector.shape_cast %73 : vector<8xf32> to vector<8x1xf32>
    %75 = tpu.reciprocal %74 {approx = true} : vector<8x1xf32> -> vector<8x1xf32>
    %76 = vector.broadcast %75 : vector<8x1xf32> to vector<8x8xf32>
    %77 = arith.mulf %72, %76 : vector<8x8xf32>
    %78 = arith.truncf %77 : vector<8x8xf32> to vector<8x8xbf16>
    %79 = vector.extract_strided_slice %22 {offsets = [0, 16], sizes = [8, 8], strides = [1, 1]} : vector<8x32xbf16> to vector<8x8xbf16>
    %cst_31 = arith.constant dense<0.000000e+00> : vector<8x8xf32>
    %80 = tpu.matmul %78, %79, %cst_31 {dimension_numbers = #tpu.dot_dimension_numbers<[1], [0], [0], [1], [0, 0, 1, 1], [], []>} : vector<8x8xbf16>, vector<8x8xbf16>, vector<8x8xf32> -> vector<8x8xf32>
    %81 = arith.truncf %80 : vector<8x8xf32> to vector<8x8xbf16>
    %82 = vector.extract_strided_slice %23 {offsets = [16, 0], sizes = [8, 32], strides = [1, 1]} : vector<32x32xbf16> to vector<8x32xbf16>
    %cst_32 = arith.constant dense<0.000000e+00> : vector<8x32xf32>
    %83 = tpu.matmul %81, %82, %cst_32 {dimension_numbers = #tpu.dot_dimension_numbers<[1], [0], [0], [1], [0, 0, 1, 1], [], []>} : vector<8x8xbf16>, vector<8x32xbf16>, vector<8x32xf32> -> vector<8x32xf32>
    %84 = arith.addf %64, %83 : vector<8x32xf32>
    %85 = vector.extract_strided_slice %18 {offsets = [0, 24], sizes = [8, 8], strides = [1, 1]} : vector<8x32xbf16> to vector<8x8xbf16>
    %86 = vector.extract_strided_slice %20 {offsets = [0, 24], sizes = [8, 8], strides = [1, 1]} : vector<8x32xbf16> to vector<8x8xbf16>
    %cst_33 = arith.constant dense<0.000000e+00> : vector<8x8xf32>
    %87 = tpu.matmul %85, %86, %cst_33 {dimension_numbers = #tpu.dot_dimension_numbers<[1], [1], [0], [0], [0, 0, 1, 0], [], []>} : vector<8x8xbf16>, vector<8x8xbf16>, vector<8x8xf32> -> vector<8x8xf32>
    %cst_34 = arith.constant dense<0xFF800000> : vector<8xf32>
    %88 = vector.multi_reduction <maximumf>, %87, %cst_34 [1] : vector<8x8xf32> to vector<8xf32>
    %89 = vector.shape_cast %88 : vector<8xf32> to vector<8x1xf32>
    %90 = vector.broadcast %89 : vector<8x1xf32> to vector<8x8xf32>
    %91 = arith.subf %87, %90 : vector<8x8xf32>
    %92 = math.exp %91 : vector<8x8xf32>
    %cst_35 = arith.constant dense<0.000000e+00> : vector<8xf32>
    %93 = vector.multi_reduction <add>, %92, %cst_35 [1] : vector<8x8xf32> to vector<8xf32>
    %94 = vector.shape_cast %93 : vector<8xf32> to vector<8x1xf32>
    %95 = tpu.reciprocal %94 {approx = true} : vector<8x1xf32> -> vector<8x1xf32>
    %96 = vector.broadcast %95 : vector<8x1xf32> to vector<8x8xf32>
    %97 = arith.mulf %92, %96 : vector<8x8xf32>
    %98 = arith.truncf %97 : vector<8x8xf32> to vector<8x8xbf16>
    %99 = vector.extract_strided_slice %22 {offsets = [0, 24], sizes = [8, 8], strides = [1, 1]} : vector<8x32xbf16> to vector<8x8xbf16>
    %cst_36 = arith.constant dense<0.000000e+00> : vector<8x8xf32>
    %100 = tpu.matmul %98, %99, %cst_36 {dimension_numbers = #tpu.dot_dimension_numbers<[1], [0], [0], [1], [0, 0, 1, 1], [], []>} : vector<8x8xbf16>, vector<8x8xbf16>, vector<8x8xf32> -> vector<8x8xf32>
    %101 = arith.truncf %100 : vector<8x8xf32> to vector<8x8xbf16>
    %102 = vector.extract_strided_slice %23 {offsets = [24, 0], sizes = [8, 32], strides = [1, 1]} : vector<32x32xbf16> to vector<8x32xbf16>
    %cst_37 = arith.constant dense<0.000000e+00> : vector<8x32xf32>
    %103 = tpu.matmul %101, %102, %cst_37 {dimension_numbers = #tpu.dot_dimension_numbers<[1], [0], [0], [1], [0, 0, 1, 1], [], []>} : vector<8x8xbf16>, vector<8x32xbf16>, vector<8x32xf32> -> vector<8x32xf32>
    %104 = arith.addf %84, %103 : vector<8x32xf32>
    %105 = arith.addf %1, %104 : vector<8x32xf32>
    %c0_38 = arith.constant 0 : index
    %c0_39 = arith.constant 0 : index
    %106 = vector.load %arg9[%c0_38, %c0_39] : memref<1x32xf32, #tpu.memory_space<vmem>>, vector<1x32xf32>
    %107 = vector.broadcast %106 : vector<1x32xf32> to vector<8x32xf32>
    %108 = arith.addf %105, %107 : vector<8x32xf32>
    %cst_40 = arith.constant dense<0.000000e+00> : vector<8xf32>
    %109 = vector.multi_reduction <add>, %108, %cst_40 [1] : vector<8x32xf32> to vector<8xf32>
    %110 = vector.shape_cast %109 : vector<8xf32> to vector<8x1xf32>
    %cst_41 = arith.constant 3.200000e+01 : f32
    %111 = vector.broadcast %cst_41 : f32 to vector<8x1xf32>
    %112 = arith.divf %110, %111 : vector<8x1xf32>
    %113 = vector.broadcast %112 : vector<8x1xf32> to vector<8x32xf32>
    %114 = arith.subf %108, %113 : vector<8x32xf32>
    %115 = arith.mulf %114, %114 : vector<8x32xf32>
    %cst_42 = arith.constant dense<0.000000e+00> : vector<8xf32>
    %116 = vector.multi_reduction <add>, %115, %cst_42 [1] : vector<8x32xf32> to vector<8xf32>
    %117 = vector.shape_cast %116 : vector<8xf32> to vector<8x1xf32>
    %cst_43 = arith.constant 3.200000e+01 : f32
    %118 = vector.broadcast %cst_43 : f32 to vector<8x1xf32>
    %119 = arith.divf %117, %118 : vector<8x1xf32>
    %120 = vector.broadcast %112 : vector<8x1xf32> to vector<8x32xf32>
    %121 = arith.subf %108, %120 : vector<8x32xf32>
    %cst_44 = arith.constant 9.99999974E-6 : f32
    %122 = vector.broadcast %cst_44 : f32 to vector<8x1xf32>
    %123 = arith.addf %119, %122 : vector<8x1xf32>
    %124 = math.rsqrt %123 : vector<8x1xf32>
    %125 = vector.broadcast %124 : vector<8x1xf32> to vector<8x32xf32>
    %126 = arith.mulf %121, %125 : vector<8x32xf32>
    %c0_45 = arith.constant 0 : index
    %c0_46 = arith.constant 0 : index
    %127 = vector.load %arg10[%c0_45, %c0_46] : memref<1x32xf32, #tpu.memory_space<vmem>>, vector<1x32xf32>
    %128 = vector.broadcast %127 : vector<1x32xf32> to vector<8x32xf32>
    %129 = arith.mulf %126, %128 : vector<8x32xf32>
    %c0_47 = arith.constant 0 : index
    %c0_48 = arith.constant 0 : index
    %130 = vector.load %arg11[%c0_47, %c0_48] : memref<1x32xf32, #tpu.memory_space<vmem>>, vector<1x32xf32>
    %131 = vector.broadcast %130 : vector<1x32xf32> to vector<8x32xf32>
    %132 = arith.addf %129, %131 : vector<8x32xf32>
    %c0_49 = arith.constant 0 : index
    %c0_50 = arith.constant 0 : index
    %c0_51 = arith.constant 0 : index
    %133 = vector.load %arg12[%c0_49, %c0_50, %c0_51] : memref<1x8x32xf32, #tpu.memory_space<vmem>>, vector<1x8x32xf32>
    %134 = vector.shape_cast %133 : vector<1x8x32xf32> to vector<8x32xf32>
    %135 = vector.shape_cast %132 : vector<8x32xf32> to vector<1x8x32xf32>
    tpu.vector_store %arg12[%c0_49, %c0_50, %c0_51], %135 {strides = array<i32>} : memref<1x8x32xf32, #tpu.memory_space<vmem>>, vector<1x8x32xf32>,
    return
  }
  func.func @transform_0(%arg0: i32, %arg1: i32) -> (i32, i32, i32) {
    %c0_i32 = arith.constant 0 : i32
    %c0_i32_0 = arith.constant 0 : i32
    return %arg0, %arg1, %c0_i32 : i32, i32, i32
  }
  func.func @transform_1(%arg0: i32, %arg1: i32) -> (i32, i32, i32) {
    %c0_i32 = arith.constant 0 : i32
    %c0_i32_0 = arith.constant 0 : i32
    %c0_i32_1 = arith.constant 0 : i32
    return %arg0, %c0_i32, %c0_i32_0 : i32, i32, i32
  }
  func.func @transform_2(%arg0: i32, %arg1: i32) -> (i32, i32) {
    %c0_i32 = arith.constant 0 : i32
    %c0_i32_0 = arith.constant 0 : i32
    %c0_i32_1 = arith.constant 0 : i32
    return %c0_i32, %c0_i32_0 : i32, i32
  }
  func.func @transform_3(%arg0: i32, %arg1: i32) -> (i32, i32) {
    %c0_i32 = arith.constant 0 : i32
    %c0_i32_0 = arith.constant 0 : i32
    %c0_i32_1 = arith.constant 0 : i32
    return %c0_i32, %c0_i32_0 : i32, i32
  }
  func.func @transform_4(%arg0: i32, %arg1: i32) -> (i32, i32) {
    %c0_i32 = arith.constant 0 : i32
    %c0_i32_0 = arith.constant 0 : i32
    %c0_i32_1 = arith.constant 0 : i32
    return %c0_i32, %c0_i32_0 : i32, i32
  }
  func.func @transform_5(%arg0: i32, %arg1: i32) -> (i32, i32) {
    %c0_i32 = arith.constant 0 : i32
    %c0_i32_0 = arith.constant 0 : i32
    %c0_i32_1 = arith.constant 0 : i32
    return %c0_i32, %c0_i32_0 : i32, i32
  }
  func.func @transform_6(%arg0: i32, %arg1: i32) -> (i32, i32) {
    %c0_i32 = arith.constant 0 : i32
    %c0_i32_0 = arith.constant 0 : i32
    %c0_i32_1 = arith.constant 0 : i32
    return %c0_i32, %c0_i32_0 : i32, i32
  }
  func.func @transform_7(%arg0: i32, %arg1: i32) -> (i32, i32) {
    %c0_i32 = arith.constant 0 : i32
    %c0_i32_0 = arith.constant 0 : i32
    %c0_i32_1 = arith.constant 0 : i32
    return %c0_i32, %c0_i32_0 : i32, i32
  }
  func.func @transform_8(%arg0: i32, %arg1: i32) -> (i32, i32) {
    %c0_i32 = arith.constant 0 : i32
    %c0_i32_0 = arith.constant 0 : i32
    %c0_i32_1 = arith.constant 0 : i32
    return %c0_i32, %c0_i32_0 : i32, i32
  }
  func.func @transform_9(%arg0: i32, %arg1: i32) -> (i32, i32) {
    %c0_i32 = arith.constant 0 : i32
    %c0_i32_0 = arith.constant 0 : i32
    %c0_i32_1 = arith.constant 0 : i32
    return %c0_i32, %c0_i32_0 : i32, i32
  }
  func.func @transform_10(%arg0: i32, %arg1: i32) -> (i32, i32, i32) {
    %c0_i32 = arith.constant 0 : i32
    %c0_i32_0 = arith.constant 0 : i32
    return %arg0, %arg1, %c0_i32 : i32, i32, i32
  }
}

module attributes {stable_mosaic.version = 11 : i64} {
  func.func @_moe_block_kernel(%arg0: i32, %arg1: i32, %arg2: memref<16x32xf32, #tpu.memory_space<vmem>>, %arg3: memref<32x4xbf16, #tpu.memory_space<vmem>>, %arg4: memref<1x4xf32, #tpu.memory_space<vmem>>, %arg5: memref<1x32x32xbf16, #tpu.memory_space<vmem>>, %arg6: memref<1x1x32xf32, #tpu.memory_space<vmem>>, %arg7: memref<1x32xf32, #tpu.memory_space<vmem>>, %arg8: memref<1x32xf32, #tpu.memory_space<vmem>>, %arg9: memref<16x32xf32, #tpu.memory_space<vmem>>, %arg10: memref<16x32xf32, #tpu.memory_space<vmem>>) attributes {dimension_semantics = [#tpu.dimension_semantics<parallel>, #tpu.dimension_semantics<arbitrary>], iteration_bounds = array<i64: 1, 4>, scalar_prefetch = 0 : i64, scratch_operands = 1 : i64, tpu.core_type = #tpu.core_type<tc>, window_params = [{transform_indices = @transform_0, window_bounds = array<i64: 16, 32>}, {pipeline_mode = #tpu.pipeline_mode<synchronous>, transform_indices = @transform_1, window_bounds = array<i64: 32, 4>}, {pipeline_mode = #tpu.pipeline_mode<synchronous>, transform_indices = @transform_2, window_bounds = array<i64: 1, 4>}, {transform_indices = @transform_3, window_bounds = array<i64: 1, 32, 32>}, {transform_indices = @transform_4, window_bounds = array<i64: 1, 1, 32>}, {pipeline_mode = #tpu.pipeline_mode<synchronous>, transform_indices = @transform_5, window_bounds = array<i64: 1, 32>}, {pipeline_mode = #tpu.pipeline_mode<synchronous>, transform_indices = @transform_6, window_bounds = array<i64: 1, 32>}, {transform_indices = @transform_7, window_bounds = array<i64: 16, 32>}]} {
    %c0 = arith.constant 0 : index
    %c0_0 = arith.constant 0 : index
    %0 = vector.load %arg2[%c0, %c0_0] : memref<16x32xf32, #tpu.memory_space<vmem>>, vector<16x32xf32>
    %1 = arith.truncf %0 : vector<16x32xf32> to vector<16x32xbf16>
    %c0_i32 = arith.constant 0 : i32
    %2 = arith.cmpi eq, %arg1, %c0_i32 : i32
    %3 = arith.extui %2 : i1 to i32
    %c0_i32_1 = arith.constant 0 : i32
    %4 = arith.cmpi ne, %3, %c0_i32_1 : i32
    scf.if %4 {
      %cst_21 = arith.constant 0.000000e+00 : f32
      %47 = vector.broadcast %cst_21 : f32 to vector<16x32xf32>
      %c0_22 = arith.constant 0 : index
      %c0_23 = arith.constant 0 : index
      %48 = vector.load %arg10[%c0_22, %c0_23] : memref<16x32xf32, #tpu.memory_space<vmem>>, vector<16x32xf32>
      tpu.vector_store %arg10[%c0_22, %c0_23], %47 {strides = array<i32>} : memref<16x32xf32, #tpu.memory_space<vmem>>, vector<16x32xf32>,
    } else {
    }
    %c0_2 = arith.constant 0 : index
    %c0_3 = arith.constant 0 : index
    %5 = vector.load %arg3[%c0_2, %c0_3] : memref<32x4xbf16, #tpu.memory_space<vmem>>, vector<32x4xbf16>
    %cst = arith.constant dense<0.000000e+00> : vector<16x4xf32>
    %6 = tpu.matmul %1, %5, %cst {dimension_numbers = #tpu.dot_dimension_numbers<[1], [0], [0], [1], [0, 0, 1, 1], [], []>} : vector<16x32xbf16>, vector<32x4xbf16>, vector<16x4xf32> -> vector<16x4xf32>
    %c0_4 = arith.constant 0 : index
    %c0_5 = arith.constant 0 : index
    %7 = vector.load %arg4[%c0_4, %c0_5] : memref<1x4xf32, #tpu.memory_space<vmem>>, vector<1x4xf32>
    %8 = vector.broadcast %7 : vector<1x4xf32> to vector<16x4xf32>
    %9 = arith.addf %6, %8 : vector<16x4xf32>
    %10 = tpu.iota {dimensions = array<i32: 1>} : vector<16x4xi32>
    %11 = vector.broadcast %arg1 : i32 to vector<16x4xi32>
    %12 = arith.cmpi eq, %10, %11 : vector<16x4xi32>
    %cst_6 = arith.constant 0.000000e+00 : f32
    %13 = vector.broadcast %cst_6 : f32 to vector<16x4xf32>
    %14 = arith.select %12, %9, %13 : vector<16x4xi1>, vector<16x4xf32>
    %cst_7 = arith.constant dense<0.000000e+00> : vector<16xf32>
    %15 = vector.multi_reduction <add>, %14, %cst_7 [1] : vector<16x4xf32> to vector<16xf32>
    %16 = vector.shape_cast %15 : vector<16xf32> to vector<16x1xf32>
    %17 = vector.broadcast %16 : vector<16x1xf32> to vector<16x4xf32>
    %18 = arith.cmpf ogt, %9, %17 : vector<16x4xf32>
    %19 = vector.broadcast %16 : vector<16x1xf32> to vector<16x4xf32>
    %20 = arith.cmpf oeq, %9, %19 : vector<16x4xf32>
    %21 = vector.broadcast %arg1 : i32 to vector<16x4xi32>
    %22 = arith.cmpi slt, %10, %21 : vector<16x4xi32>
    %23 = arith.andi %20, %22 : vector<16x4xi1>
    %24 = arith.ori %18, %23 : vector<16x4xi1>
    %25 = arith.extui %24 : vector<16x4xi1> to vector<16x4xi32>
    %cst_8 = arith.constant dense<0> : vector<16xi32>
    %26 = vector.multi_reduction <add>, %25, %cst_8 [1] : vector<16x4xi32> to vector<16xi32>
    %27 = vector.shape_cast %26 : vector<16xi32> to vector<16x1xi32>
    %c2_i32 = arith.constant 2 : i32
    %28 = vector.broadcast %c2_i32 : i32 to vector<16x1xi32>
    %29 = arith.cmpi slt, %27, %28 : vector<16x1xi32>
    %30 = arith.extui %29 : vector<16x1xi1> to vector<16x1xi32>
    %31 = arith.sitofp %30 : vector<16x1xi32> to vector<16x1xf32>
    %c0_9 = arith.constant 0 : index
    %c0_10 = arith.constant 0 : index
    %c0_11 = arith.constant 0 : index
    %32 = vector.load %arg5[%c0_9, %c0_10, %c0_11] : memref<1x32x32xbf16, #tpu.memory_space<vmem>>, vector<1x32x32xbf16>
    %33 = vector.shape_cast %32 : vector<1x32x32xbf16> to vector<32x32xbf16>
    %cst_12 = arith.constant dense<0.000000e+00> : vector<16x32xf32>
    %34 = tpu.matmul %1, %33, %cst_12 {dimension_numbers = #tpu.dot_dimension_numbers<[1], [0], [0], [1], [0, 0, 1, 1], [], []>} : vector<16x32xbf16>, vector<32x32xbf16>, vector<16x32xf32> -> vector<16x32xf32>
    %c0_13 = arith.constant 0 : index
    %c0_14 = arith.constant 0 : index
    %c0_15 = arith.constant 0 : index
    %35 = vector.load %arg6[%c0_13, %c0_14, %c0_15] : memref<1x1x32xf32, #tpu.memory_space<vmem>>, vector<1x1x32xf32>
    %36 = vector.shape_cast %35 : vector<1x1x32xf32> to vector<1x32xf32>
    %37 = vector.broadcast %36 : vector<1x32xf32> to vector<16x32xf32>
    %38 = arith.addf %34, %37 : vector<16x32xf32>
    %c0_16 = arith.constant 0 : index
    %c0_17 = arith.constant 0 : index
    %39 = vector.load %arg10[%c0_16, %c0_17] : memref<16x32xf32, #tpu.memory_space<vmem>>, vector<16x32xf32>
    %40 = vector.broadcast %31 : vector<16x1xf32> to vector<16x32xf32>
    %41 = arith.mulf %40, %38 : vector<16x32xf32>
    %42 = arith.addf %39, %41 : vector<16x32xf32>
    %c0_18 = arith.constant 0 : index
    %c0_19 = arith.constant 0 : index
    %43 = vector.load %arg10[%c0_18, %c0_19] : memref<16x32xf32, #tpu.memory_space<vmem>>, vector<16x32xf32>
    tpu.vector_store %arg10[%c0_18, %c0_19], %42 {strides = array<i32>} : memref<16x32xf32, #tpu.memory_space<vmem>>, vector<16x32xf32>,
    %c3_i32 = arith.constant 3 : i32
    %44 = arith.cmpi eq, %arg1, %c3_i32 : i32
    %45 = arith.extui %44 : i1 to i32
    %c0_i32_20 = arith.constant 0 : i32
    %46 = arith.cmpi ne, %45, %c0_i32_20 : i32
    scf.if %46 {
      %c0_21 = arith.constant 0 : index
      %c0_22 = arith.constant 0 : index
      %47 = vector.load %arg10[%c0_21, %c0_22] : memref<16x32xf32, #tpu.memory_space<vmem>>, vector<16x32xf32>
      %48 = arith.addf %0, %47 : vector<16x32xf32>
      %cst_23 = arith.constant dense<0.000000e+00> : vector<16xf32>
      %49 = vector.multi_reduction <add>, %48, %cst_23 [1] : vector<16x32xf32> to vector<16xf32>
      %50 = vector.shape_cast %49 : vector<16xf32> to vector<16x1xf32>
      %cst_24 = arith.constant 3.200000e+01 : f32
      %51 = vector.broadcast %cst_24 : f32 to vector<16x1xf32>
      %52 = arith.divf %50, %51 : vector<16x1xf32>
      %53 = vector.broadcast %52 : vector<16x1xf32> to vector<16x32xf32>
      %54 = arith.subf %48, %53 : vector<16x32xf32>
      %55 = arith.mulf %54, %54 : vector<16x32xf32>
      %cst_25 = arith.constant dense<0.000000e+00> : vector<16xf32>
      %56 = vector.multi_reduction <add>, %55, %cst_25 [1] : vector<16x32xf32> to vector<16xf32>
      %57 = vector.shape_cast %56 : vector<16xf32> to vector<16x1xf32>
      %cst_26 = arith.constant 3.200000e+01 : f32
      %58 = vector.broadcast %cst_26 : f32 to vector<16x1xf32>
      %59 = arith.divf %57, %58 : vector<16x1xf32>
      %60 = vector.broadcast %52 : vector<16x1xf32> to vector<16x32xf32>
      %61 = arith.subf %48, %60 : vector<16x32xf32>
      %cst_27 = arith.constant 9.99999974E-6 : f32
      %62 = vector.broadcast %cst_27 : f32 to vector<16x1xf32>
      %63 = arith.addf %59, %62 : vector<16x1xf32>
      %64 = math.rsqrt %63 : vector<16x1xf32>
      %65 = vector.broadcast %64 : vector<16x1xf32> to vector<16x32xf32>
      %66 = arith.mulf %61, %65 : vector<16x32xf32>
      %c0_28 = arith.constant 0 : index
      %c0_29 = arith.constant 0 : index
      %67 = vector.load %arg7[%c0_28, %c0_29] : memref<1x32xf32, #tpu.memory_space<vmem>>, vector<1x32xf32>
      %68 = vector.broadcast %67 : vector<1x32xf32> to vector<16x32xf32>
      %69 = arith.mulf %66, %68 : vector<16x32xf32>
      %c0_30 = arith.constant 0 : index
      %c0_31 = arith.constant 0 : index
      %70 = vector.load %arg8[%c0_30, %c0_31] : memref<1x32xf32, #tpu.memory_space<vmem>>, vector<1x32xf32>
      %71 = vector.broadcast %70 : vector<1x32xf32> to vector<16x32xf32>
      %72 = arith.addf %69, %71 : vector<16x32xf32>
      %c0_32 = arith.constant 0 : index
      %c0_33 = arith.constant 0 : index
      %73 = vector.load %arg9[%c0_32, %c0_33] : memref<16x32xf32, #tpu.memory_space<vmem>>, vector<16x32xf32>
      tpu.vector_store %arg9[%c0_32, %c0_33], %72 {strides = array<i32>} : memref<16x32xf32, #tpu.memory_space<vmem>>, vector<16x32xf32>,
    } else {
    }
    return
  }
  func.func @transform_0(%arg0: i32, %arg1: i32) -> (i32, i32) {
    %c0_i32 = arith.constant 0 : i32
    %c0_i32_0 = arith.constant 0 : i32
    return %arg0, %c0_i32 : i32, i32
  }
  func.func @transform_1(%arg0: i32, %arg1: i32) -> (i32, i32) {
    %c0_i32 = arith.constant 0 : i32
    %c0_i32_0 = arith.constant 0 : i32
    %c0_i32_1 = arith.constant 0 : i32
    return %c0_i32, %c0_i32_0 : i32, i32
  }
  func.func @transform_2(%arg0: i32, %arg1: i32) -> (i32, i32) {
    %c0_i32 = arith.constant 0 : i32
    %c0_i32_0 = arith.constant 0 : i32
    %c0_i32_1 = arith.constant 0 : i32
    return %c0_i32, %c0_i32_0 : i32, i32
  }
  func.func @transform_3(%arg0: i32, %arg1: i32) -> (i32, i32, i32) {
    %c0_i32 = arith.constant 0 : i32
    %c0_i32_0 = arith.constant 0 : i32
    %c0_i32_1 = arith.constant 0 : i32
    return %arg1, %c0_i32, %c0_i32_0 : i32, i32, i32
  }
  func.func @transform_4(%arg0: i32, %arg1: i32) -> (i32, i32, i32) {
    %c0_i32 = arith.constant 0 : i32
    %c0_i32_0 = arith.constant 0 : i32
    %c0_i32_1 = arith.constant 0 : i32
    return %arg1, %c0_i32, %c0_i32_0 : i32, i32, i32
  }
  func.func @transform_5(%arg0: i32, %arg1: i32) -> (i32, i32) {
    %c0_i32 = arith.constant 0 : i32
    %c0_i32_0 = arith.constant 0 : i32
    %c0_i32_1 = arith.constant 0 : i32
    return %c0_i32, %c0_i32_0 : i32, i32
  }
  func.func @transform_6(%arg0: i32, %arg1: i32) -> (i32, i32) {
    %c0_i32 = arith.constant 0 : i32
    %c0_i32_0 = arith.constant 0 : i32
    %c0_i32_1 = arith.constant 0 : i32
    return %c0_i32, %c0_i32_0 : i32, i32
  }
  func.func @transform_7(%arg0: i32, %arg1: i32) -> (i32, i32) {
    %c0_i32 = arith.constant 0 : i32
    %c0_i32_0 = arith.constant 0 : i32
    return %arg0, %c0_i32 : i32, i32
  }
}

module attributes {stable_mosaic.version = 11 : i64} {
  func.func @_pool_head_kernel(%arg0: i32, %arg1: memref<1x8x32xf32, #tpu.memory_space<vmem>>, %arg2: memref<1x32xbf16, #tpu.memory_space<vmem>>, %arg3: memref<1x1xf32, #tpu.memory_space<vmem>>, %arg4: memref<1x1x1xf32, #tpu.memory_space<vmem>>) attributes {dimension_semantics = [#tpu.dimension_semantics<parallel>], iteration_bounds = array<i64: 2>, scalar_prefetch = 0 : i64, scratch_operands = 0 : i64, tpu.core_type = #tpu.core_type<tc>, window_params = [{transform_indices = @transform_0, window_bounds = array<i64: 1, 8, 32>}, {pipeline_mode = #tpu.pipeline_mode<synchronous>, transform_indices = @transform_1, window_bounds = array<i64: 1, 32>}, {pipeline_mode = #tpu.pipeline_mode<synchronous>, transform_indices = @transform_2, window_bounds = array<i64: 1, 1>}, {transform_indices = @transform_3, window_bounds = array<i64: 1, 1, 1>}]} {
    %c0 = arith.constant 0 : index
    %c0_0 = arith.constant 0 : index
    %c0_1 = arith.constant 0 : index
    %0 = vector.load %arg1[%c0, %c0_0, %c0_1] : memref<1x8x32xf32, #tpu.memory_space<vmem>>, vector<1x8x32xf32>
    %1 = vector.shape_cast %0 : vector<1x8x32xf32> to vector<8x32xf32>
    %cst = arith.constant dense<0.000000e+00> : vector<32xf32>
    %2 = vector.multi_reduction <add>, %1, %cst [0] : vector<8x32xf32> to vector<32xf32>
    %3 = vector.shape_cast %2 : vector<32xf32> to vector<1x32xf32>
    %cst_2 = arith.constant 1.250000e-01 : f32
    %4 = vector.broadcast %cst_2 : f32 to vector<1x32xf32>
    %5 = arith.mulf %3, %4 : vector<1x32xf32>
    %6 = arith.truncf %5 : vector<1x32xf32> to vector<1x32xbf16>
    %c0_3 = arith.constant 0 : index
    %c0_4 = arith.constant 0 : index
    %7 = vector.load %arg2[%c0_3, %c0_4] : memref<1x32xbf16, #tpu.memory_space<vmem>>, vector<1x32xbf16>
    %8 = arith.extf %6 : vector<1x32xbf16> to vector<1x32xf32>
    %9 = arith.extf %7 : vector<1x32xbf16> to vector<1x32xf32>
    %cst_5 = arith.constant dense<0.000000e+00> : vector<1xf32>
    %10 = arith.mulf %8, %9 : vector<1x32xf32>
    %11 = vector.multi_reduction <add>, %10, %cst_5 [1] : vector<1x32xf32> to vector<1xf32>
    %12 = vector.shape_cast %11 : vector<1xf32> to vector<1x1xf32>
    %c0_6 = arith.constant 0 : index
    %c0_7 = arith.constant 0 : index
    %13 = vector.load %arg3[%c0_6, %c0_7] : memref<1x1xf32, #tpu.memory_space<vmem>>, vector<1x1xf32>
    %14 = arith.addf %12, %13 : vector<1x1xf32>
    %c0_8 = arith.constant 0 : index
    %c0_9 = arith.constant 0 : index
    %c0_10 = arith.constant 0 : index
    %15 = vector.load %arg4[%c0_8, %c0_9, %c0_10] : memref<1x1x1xf32, #tpu.memory_space<vmem>>, vector<1x1x1xf32>
    %16 = vector.shape_cast %15 : vector<1x1x1xf32> to vector<1x1xf32>
    %17 = vector.shape_cast %14 : vector<1x1xf32> to vector<1x1x1xf32>
    tpu.vector_store %arg4[%c0_8, %c0_9, %c0_10], %17 {strides = array<i32>} : memref<1x1x1xf32, #tpu.memory_space<vmem>>, vector<1x1x1xf32>,
    return
  }
  func.func @transform_0(%arg0: i32) -> (i32, i32, i32) {
    %c0_i32 = arith.constant 0 : i32
    %c0_i32_0 = arith.constant 0 : i32
    %c0_i32_1 = arith.constant 0 : i32
    return %arg0, %c0_i32, %c0_i32_0 : i32, i32, i32
  }
  func.func @transform_1(%arg0: i32) -> (i32, i32) {
    %c0_i32 = arith.constant 0 : i32
    %c0_i32_0 = arith.constant 0 : i32
    %c0_i32_1 = arith.constant 0 : i32
    return %c0_i32, %c0_i32_0 : i32, i32
  }
  func.func @transform_2(%arg0: i32) -> (i32, i32) {
    %c0_i32 = arith.constant 0 : i32
    %c0_i32_0 = arith.constant 0 : i32
    %c0_i32_1 = arith.constant 0 : i32
    return %c0_i32, %c0_i32_0 : i32, i32
  }
  func.func @transform_3(%arg0: i32) -> (i32, i32, i32) {
    %c0_i32 = arith.constant 0 : i32
    %c0_i32_0 = arith.constant 0 : i32
    %c0_i32_1 = arith.constant 0 : i32
    return %arg0, %c0_i32, %c0_i32_0 : i32, i32, i32
  }
}

</mosaic_0001>

<llo_original>
// kernel: esm_decoder_full_moe.13
$region0: #{esm_decoder_full_moe.13}
  #allocation0 [shape = 'u32[]', space=smem, size = 0x4, offset = 0x4, fixed_abs, tag = 'smem constant byte address 0x4 - core index']
  #allocation1 [shape = 'u32[144,128]{1,0:T(1,128)}', space=vmem, size = 0x12000, scoped, tag = 'internal scratch']
  #allocation2 [shape = 'f32[1,1]{1,0:T(1,128)S(1)}', space=vmem, size = 0x200, scoped, tag = 'scoped memory for esm_decoder_full_moe.13']
  %s0 = inlined_call_operand.vmem [shape: f32[2,8,32], index: 0, kind: input, shape index: {}]
  %s1 = inlined_call_operand.vmem [shape: bf16[1,32], index: 1, kind: input, shape index: {}]
  %s2 = inlined_call_operand.<no memory space> [shape: f32[1,1], index: 2, kind: input, shape index: {}]
  %s3 = inlined_call_operand.vmem [shape: f32[2,1,1], index: 3, kind: output, shape index: {}]
  %s4 = sld [smem:[#allocation0]]
  $region45: #{esm_decoder_full_moe.13} parent=0
    _
  %s6 = ssub.s32 1, %s4
  %s7 = scalar_select 0, %s6, %s4
  %v8 = vstv %s2
  %9 = vst [vmem:[#allocation2] sm:$0x1] %v8
  loop: start=0, step=1, limit=4
  $region2: #{esm_decoder_full_moe.13} parent=0 // loop_pre_header
    _
  $region3: #{esm_decoder_full_moe.13} parent=0 // loop_header
    %s11 = sphi 0, %s15
    %p12 = scmp.ge.s32.totalorder %s11, 4
    %s21 = sphi 0, %s23
    %s24 = sphi 0, %s21
    %s25 = sphi 0, %s24
    %s41 = sphi 0, %s25
    %s45 = sphi 0, %s45
    %s47 = sphi 0, %s45
    %s48 = sphi 0, %s47
    %s62 = sphi 0, %s48
    %s66 = sphi 0, %s66
    %s68 = sphi 0, %s66
    %s69 = sphi 0, %s68
    %s83 = sphi 0, %s69
    %s89 = sphi 0, %s91
    %s92 = sphi 0, %s89
    %s93 = sphi 0, %s92
    %s109 = sphi 0, %s93
  $region4: #{esm_decoder_full_moe.13} parent=0 // loop_header_branch
    %14 = sbr.rel (%p12) target = $region8
  $region5: #{esm_decoder_full_moe.13} parent=0 // loop_body
    %s16 = ssub.s32 %s11, 1
    %s17 = ssub.s32 %s11, 2
    %s18 = sadd.s32 %s11, 1
    %s19 = ssub.s32 %s11, %s18
    %p20 = scmp.eq.s32.totalorder %s19, 0
    %s22 = sadd.s32 %s21, 1
    %s23 = scalar_select %p20, %s21, %s22
    %p26 = pneg %p20
    %p27 = scmp.eq.s32.totalorder %s11, 1
    %p28 = por %p26, %p27
    %p29 = scmp.ne.s32.totalorder %s21, %s24
    %p30 = scmp.eq.s32.totalorder %s11, 0
    %p31 = por %p29, %p30
    %p32 = scmp.ne.s32.totalorder %s21, %s24
    %p33 = scmp.eq.s32.totalorder %s16, 1
    %p34 = por %p32, %p33
    %p35 = scmp.ne.s32.totalorder %s24, %s25
    %p36 = scmp.eq.s32.totalorder %s16, 0
    %p37 = por %p35, %p36
    %p38 = scmp.ne.s32.totalorder %s24, %s25
    %p39 = scmp.eq.s32.totalorder %s17, 1
    %p40 = por %p38, %p39
    %p42 = scmp.ne.s32.totalorder %s25, %s41
    %p43 = scmp.eq.s32.totalorder %s17, 0
    %p44 = por %p42, %p43
    %s46 = sadd.s32 %s45, 1
    %p49 = scmp.eq.s32.totalorder %s11, 1
    %p50 = scmp.ne.s32.totalorder %s45, %s47
    %p51 = scmp.eq.s32.totalorder %s11, 0
    %p52 = por %p50, %p51
    %p53 = scmp.ne.s32.totalorder %s45, %s47
    %p54 = scmp.eq.s32.totalorder %s16, 1
    %p55 = por %p53, %p54
    %p56 = scmp.ne.s32.totalorder %s47, %s48
    %p57 = scmp.eq.s32.totalorder %s16, 0
    %p58 = por %p56, %p57
    %p59 = scmp.ne.s32.totalorder %s47, %s48
    %p60 = scmp.eq.s32.totalorder %s17, 1
    %p61 = por %p59, %p60
    %p63 = scmp.ne.s32.totalorder %s48, %s62
    %p64 = scmp.eq.s32.totalorder %s17, 0
    %p65 = por %p63, %p64
    %s67 = sadd.s32 %s66, 1
    %p70 = scmp.eq.s32.totalorder %s11, 1
    %p71 = scmp.ne.s32.totalorder %s66, %s68
    %p72 = scmp.eq.s32.totalorder %s11, 0
    %p73 = por %p71, %p72
    %p74 = scmp.ne.s32.totalorder %s66, %s68
    %p75 = scmp.eq.s32.totalorder %s16, 1
    %p76 = por %p74, %p75
    %p77 = scmp.ne.s32.totalorder %s68, %s69
    %p78 = scmp.eq.s32.totalorder %s16, 0
    %p79 = por %p77, %p78
    %p80 = scmp.ne.s32.totalorder %s68, %s69
    %p81 = scmp.eq.s32.totalorder %s17, 1
    %p82 = por %p80, %p81
    %p84 = scmp.ne.s32.totalorder %s69, %s83
    %p85 = scmp.eq.s32.totalorder %s17, 0
    %p86 = por %p84, %p85
    %s87 = ssub.s32 %s11, %s18
    %p88 = scmp.eq.s32.totalorder %s87, 0
    %s90 = sadd.s32 %s89, 1
    %s91 = scalar_select %p88, %s89, %s90
    %p94 = pneg %p88
    %p95 = scmp.eq.s32.totalorder %s11, 1
    %p96 = por %p94, %p95
    %p97 = scmp.ne.s32.totalorder %s89, %s92
    %p98 = scmp.eq.s32.totalorder %s11, 0
    %p99 = por %p97, %p98
    %p100 = scmp.ne.s32.totalorder %s89, %s92
    %p101 = scmp.eq.s32.totalorder %s16, 1
    %p102 = por %p100, %p101
    %p103 = scmp.ne.s32.totalorder %s92, %s93
    %p104 = scmp.eq.s32.totalorder %s16, 0
    %p105 = por %p103, %p104
    %p106 = scmp.ne.s32.totalorder %s92, %s93
    %p107 = scmp.eq.s32.totalorder %s17, 1
    %p108 = por %p106, %p107
    %p110 = scmp.ne.s32.totalorder %s93, %s109
    %p111 = scmp.eq.s32.totalorder %s17, 0
    %p112 = por %p110, %p111
    %p113 = scmp.le.s32.totalorder 1, %s11
    %p114 = scmp.lt.s32.totalorder %s11, 3
    %p115 = pnand %p113, %p114
    %p116 = pneg %p115
    // Predicated region
    $region9: #{esm_decoder_full_moe.13} parent=5 // pred_check
      _
    $region10: #{esm_decoder_full_moe.13} parent=5 // pred_check_branch
      %118 = sbr.rel (%p115) target = $region12
    $region11: #{esm_decoder_full_moe.13} parent=5 // pred_region
      %s119 = ssub.s32 %s11, 1
      // Predicated region
      $region13: #{esm_decoder_full_moe.13} parent=11 // pred_check
        %p120 = pneg %p58
      $region14: #{esm_decoder_full_moe.13} parent=11 // pred_check_branch
        %122 = sbr.rel (%p120) target = $region16
      $region15: #{esm_decoder_full_moe.13} parent=11 // pred_region
        _
      $region16: #{esm_decoder_full_moe.13} parent=11 // pred_fallthru
        _
      // Predicated region
      $region17: #{esm_decoder_full_moe.13} parent=11 // pred_check
        %p123 = pneg %p79
      $region18: #{esm_decoder_full_moe.13} parent=11 // pred_check_branch
        %125 = sbr.rel (%p123) target = $region20
      $region19: #{esm_decoder_full_moe.13} parent=11 // pred_region
        _
      $region20: #{esm_decoder_full_moe.13} parent=11 // pred_fallthru
        _
    $region12: #{esm_decoder_full_moe.13} parent=5 // pred_fallthru
      _
    %p126 = scmp.lt.s32.totalorder %s11, 2
    // Predicated region
    $region21: #{esm_decoder_full_moe.13} parent=5 // pred_check
      %p127 = pneg %p126
    $region22: #{esm_decoder_full_moe.13} parent=5 // pred_check_branch
      %129 = sbr.rel (%p127) target = $region24
    $region23: #{esm_decoder_full_moe.13} parent=5 // pred_region
      // Predicated region
      $region25: #{esm_decoder_full_moe.13} parent=23 // pred_check
        %p130 = pneg %p31
      $region26: #{esm_decoder_full_moe.13} parent=23 // pred_check_branch
        %132 = sbr.rel (%p130) target = $region28
      $region27: #{esm_decoder_full_moe.13} parent=23 // pred_region
        %p133 = scmp.lt.s32.totalorder %s11, 1
        %s134 = scalar_select %p133, %s11, 1
        %s135 = smul.addr %s134, 8
        %s136 = scalar_lea.vmem %s0, %s135
      $region28: #{esm_decoder_full_moe.13} parent=23 // pred_fallthru
        _
    $region24: #{esm_decoder_full_moe.13} parent=5 // pred_fallthru
      _
    %p137 = scmp.le.s32.totalorder 1, %s11
    %p138 = scmp.lt.s32.totalorder %s11, 3
    %p139 = pnand %p137, %p138
    %p140 = pneg %p139
    // Predicated region
    $region29: #{esm_decoder_full_moe.13} parent=5 // pred_check
      _
    $region30: #{esm_decoder_full_moe.13} parent=5 // pred_check_branch
      %142 = sbr.rel (%p139) target = $region32
    $region31: #{esm_decoder_full_moe.13} parent=5 // pred_region
      %s143 = ssub.s32 %s11, 1
      %p144 = scmp.lt.s32.totalorder %s16, 1
      %s145 = scalar_select %p144, %s16, 1
      %s146 = smul.addr %s145, 8
      %s147 = scalar_lea.vmem %s0, %s146
      %p148 = pneg %p37
      %p149 = pneg %p34
      %p150 = pneg %p58
      %p151 = pneg %p55
      %p152 = pneg %p79
      %p153 = pneg %p76
      %p154 = pneg %p105
      %p155 = pneg %p102
      %p156 = scmp.lt.s32.totalorder %s16, 1
      %s157 = scalar_select %p156, %s16, 1
      %s158 = scalar_lea.vmem %s3, %s157
      %p159 = scmp.lt.s32.totalorder %s16, 1
      %s160 = scalar_select %p159, %s16, 1
      %s161 = smul.addr %s160, 8
      %s162 = scalar_lea.vmem %s0, %s161
      %p163 = scmp.lt.s32.totalorder %s16, 1
      %s164 = scalar_select %p163, %s16, 1
      %s165 = scalar_lea.vmem %s3, %s164
      %v166 = vld [vmem:[%s162] sm:$0xff]
      %vm167 = vcmask 261120
      %v168 = vsel %vm167, %v166, 0.0
      %v169 = vrot.slane %v168, 4
      %v170 = vadd.f32 %v168, %v169
      %v171 = vrot.slane %v170, 2
      %v172 = vadd.f32 %v170, %v171
      %v173 = vrot.slane %v172, 1
      %v174 = vadd.f32 %v172, %v173
      %v175 = vmul.f32 %v174, 0.125
      %v176 = vpack.c.bf16 %v175, %v175
      %v177 = vld [vmem:[%s1] sm:$0x1]
      %v178 = vunpack.c.l.bf16 %v176
      %v179 = vunpack.c.l.bf16 %v177
      %v180 = vmul.f32 %v178, %v179
      %vm181 = vcmask 253952
      %v182 = vsel %vm181, %v180, 0.0
      %183 = vadd.xlane.f32.xlu0 %v182
      %v184 = vpop.xlane.xlu0 %183
      %v185 = vld [vmem:[#allocation2] sm:$0x1]
      %v186 = vadd.f32 %v184, %v185
      %vm187 = vcmask 0
      %188 = vst.msk [vmem:[%s165] sm:$0x1] %vm187, %v186
      %p189 = scmp.lt.s32.totalorder %s16, 1
      %s190 = scalar_select %p189, %s16, 1
      %s191 = scalar_lea.vmem %s3, %s190
      // Predicated region
      $region33: #{esm_decoder_full_moe.13} parent=31 // pred_check
        %p192 = pneg %p102
      $region34: #{esm_decoder_full_moe.13} parent=31 // pred_check_branch
        %194 = sbr.rel (%p192) target = $region36
      $region35: #{esm_decoder_full_moe.13} parent=31 // pred_region
        _
      $region36: #{esm_decoder_full_moe.13} parent=31 // pred_fallthru
        _
    $region32: #{esm_decoder_full_moe.13} parent=5 // pred_fallthru
      _
    %p195 = scmp.le.s32.totalorder 2, %s11
    // Predicated region
    $region37: #{esm_decoder_full_moe.13} parent=5 // pred_check
      %p196 = pneg %p195
    $region38: #{esm_decoder_full_moe.13} parent=5 // pred_check_branch
      %198 = sbr.rel (%p196) target = $region40
    $region39: #{esm_decoder_full_moe.13} parent=5 // pred_region
      %s199 = ssub.s32 %s11, 2
      // Predicated region
      $region41: #{esm_decoder_full_moe.13} parent=39 // pred_check
        %p200 = pneg %p108
      $region42: #{esm_decoder_full_moe.13} parent=39 // pred_check_branch
        %202 = sbr.rel (%p200) target = $region44
      $region43: #{esm_decoder_full_moe.13} parent=39 // pred_region
        %p203 = scmp.lt.s32.totalorder %s17, 1
        %s204 = scalar_select %p203, %s17, 1
        %s205 = scalar_lea.vmem %s3, %s204
      $region44: #{esm_decoder_full_moe.13} parent=39 // pred_fallthru
        _
    $region40: #{esm_decoder_full_moe.13} parent=5 // pred_fallthru
      _
  $region6: #{esm_decoder_full_moe.13} parent=0 // loop_footer
    %s15 = sadd.s32 1, %s11
  $region7: #{esm_decoder_full_moe.13} parent=0 // loop_footer_branch
    %10 = sbr.rel target = $region3
  $region8: #{esm_decoder_full_moe.13} parent=0 // loop_exit
    _

// kernel: esm_decoder_full_moe.9
$region0: #{esm_decoder_full_moe.9}
  #allocation0 [shape = 'u32[]', space=smem, size = 0x4, offset = 0x4, fixed_abs, tag = 'smem constant byte address 0x4 - core index']
  #allocation1 [shape = 'u32[144,128]{1,0:T(1,128)}', space=vmem, size = 0x12000, scoped, tag = 'internal scratch']
  #allocation2 [shape = 'f32[16,32]{1,0:T(8,128)}', space=vmem, size = 0x2000, scoped, tag = 'scratch operand']
  %s0 = inlined_call_operand.vmem [shape: f32[16,32], index: 0, kind: input, shape index: {}]
  %s1 = inlined_call_operand.vmem [shape: bf16[32,4], index: 1, kind: input, shape index: {}]
  %s2 = inlined_call_operand.vmem [shape: f32[1,4], index: 2, kind: input, shape index: {}]
  %s3 = inlined_call_operand.vmem [shape: bf16[4,32,32], index: 3, kind: input, shape index: {}]
  %s4 = inlined_call_operand.vmem [shape: f32[4,1,32], index: 4, kind: input, shape index: {}]
  %s5 = inlined_call_operand.vmem [shape: f32[1,32], index: 5, kind: input, shape index: {}]
  %s6 = inlined_call_operand.vmem [shape: f32[1,32], index: 6, kind: input, shape index: {}]
  %s7 = inlined_call_operand.vmem [shape: f32[16,32], index: 7, kind: output, shape index: {}]
  %s8 = sld [smem:[#allocation0]]
  $region69: #{esm_decoder_full_moe.9} parent=0
    _
  %s10 = ssub.s32 1, %s8
  %s11 = scalar_select 0, %s10, %s8
  loop: start=0, step=1, limit=6
  $region2: #{esm_decoder_full_moe.9} parent=0 // loop_pre_header
    _
  $region3: #{esm_decoder_full_moe.9} parent=0 // loop_header
    %s13 = sphi 0, %s17
    %p14 = scmp.ge.s32.totalorder %s13, 6
    %s20 = sphi 0, %s32
    %s21 = sphi 0, %s28
    %s22 = sphi 0, %s20
    %s23 = sphi 0, %s21
    %s24 = sphi 0, %s22
    %s25 = sphi 0, %s23
    %s35 = sphi 0, %s37
    %s38 = sphi 0, %s35
    %s39 = sphi 0, %s38
    %s55 = sphi 0, %s39
    %s59 = sphi 0, %s59
    %s61 = sphi 0, %s59
    %s62 = sphi 0, %s61
    %s76 = sphi 0, %s62
    %s80 = sphi 0, %s80
    %s82 = sphi 0, %s80
    %s83 = sphi 0, %s82
    %s97 = sphi 0, %s83
    %s103 = sphi 0, %s105
    %s106 = sphi 0, %s103
    %s107 = sphi 0, %s106
    %s123 = sphi 0, %s107
    %s129 = sphi 0, %s131
    %s132 = sphi 0, %s129
    %s133 = sphi 0, %s132
    %s149 = sphi 0, %s133
    %s153 = sphi 0, %s153
    %s155 = sphi 0, %s153
    %s156 = sphi 0, %s155
    %s170 = sphi 0, %s156
    %s174 = sphi 0, %s174
    %s176 = sphi 0, %s174
    %s177 = sphi 0, %s176
    %s191 = sphi 0, %s177
    %s197 = sphi 0, %s199
    %s200 = sphi 0, %s197
    %s201 = sphi 0, %s200
    %s217 = sphi 0, %s201
  $region4: #{esm_decoder_full_moe.9} parent=0 // loop_header_branch
    %16 = sbr.rel (%p14) target = $region8
  $region5: #{esm_decoder_full_moe.9} parent=0 // loop_body
    %s18 = ssub.s32 %s13, 1
    %s19 = ssub.s32 %s13, 2
    %s26 = sadd.s32 1, %s21
    %p27 = scmp.ge.s32.totalorder %s26, 4
    %s28 = scalar_select %p27, 0, %s26
    %s29 = sadd.s32 1, %s20
    %s30 = scalar_select %p27, %s29, %s20
    %p31 = scmp.ge.s32.totalorder %s30, 1
    %s32 = scalar_select %p31, 0, %s30
    %s33 = ssub.s32 %s20, %s32
    %p34 = scmp.eq.s32.totalorder %s33, 0
    %s36 = sadd.s32 %s35, 1
    %s37 = scalar_select %p34, %s35, %s36
    %p40 = pneg %p34
    %p41 = scmp.eq.s32.totalorder %s13, 3
    %p42 = por %p40, %p41
    %p43 = scmp.ne.s32.totalorder %s35, %s38
    %p44 = scmp.eq.s32.totalorder %s13, 0
    %p45 = por %p43, %p44
    %p46 = scmp.ne.s32.totalorder %s35, %s38
    %p47 = scmp.eq.s32.totalorder %s18, 3
    %p48 = por %p46, %p47
    %p49 = scmp.ne.s32.totalorder %s38, %s39
    %p50 = scmp.eq.s32.totalorder %s18, 0
    %p51 = por %p49, %p50
    %p52 = scmp.ne.s32.totalorder %s38, %s39
    %p53 = scmp.eq.s32.totalorder %s19, 3
    %p54 = por %p52, %p53
    %p56 = scmp.ne.s32.totalorder %s39, %s55
    %p57 = scmp.eq.s32.totalorder %s19, 0
    %p58 = por %p56, %p57
    %s60 = sadd.s32 %s59, 1
    %p63 = scmp.eq.s32.totalorder %s13, 3
    %p64 = scmp.ne.s32.totalorder %s59, %s61
    %p65 = scmp.eq.s32.totalorder %s13, 0
    %p66 = por %p64, %p65
    %p67 = scmp.ne.s32.totalorder %s59, %s61
    %p68 = scmp.eq.s32.totalorder %s18, 3
    %p69 = por %p67, %p68
    %p70 = scmp.ne.s32.totalorder %s61, %s62
    %p71 = scmp.eq.s32.totalorder %s18, 0
    %p72 = por %p70, %p71
    %p73 = scmp.ne.s32.totalorder %s61, %s62
    %p74 = scmp.eq.s32.totalorder %s19, 3
    %p75 = por %p73, %p74
    %p77 = scmp.ne.s32.totalorder %s62, %s76
    %p78 = scmp.eq.s32.totalorder %s19, 0
    %p79 = por %p77, %p78
    %s81 = sadd.s32 %s80, 1
    %p84 = scmp.eq.s32.totalorder %s13, 3
    %p85 = scmp.ne.s32.totalorder %s80, %s82
    %p86 = scmp.eq.s32.totalorder %s13, 0
    %p87 = por %p85, %p86
    %p88 = scmp.ne.s32.totalorder %s80, %s82
    %p89 = scmp.eq.s32.totalorder %s18, 3
    %p90 = por %p88, %p89
    %p91 = scmp.ne.s32.totalorder %s82, %s83
    %p92 = scmp.eq.s32.totalorder %s18, 0
    %p93 = por %p91, %p92
    %p94 = scmp.ne.s32.totalorder %s82, %s83
    %p95 = scmp.eq.s32.totalorder %s19, 3
    %p96 = por %p94, %p95
    %p98 = scmp.ne.s32.totalorder %s83, %s97
    %p99 = scmp.eq.s32.totalorder %s19, 0
    %p100 = por %p98, %p99
    %s101 = ssub.s32 %s21, %s28
    %p102 = scmp.eq.s32.totalorder %s101, 0
    %s104 = sadd.s32 %s103, 1
    %s105 = scalar_select %p102, %s103, %s104
    %p108 = pneg %p102
    %p109 = scmp.eq.s32.totalorder %s13, 3
    %p110 = por %p108, %p109
    %p111 = scmp.ne.s32.totalorder %s103, %s106
    %p112 = scmp.eq.s32.totalorder %s13, 0
    %p113 = por %p111, %p112
    %p114 = scmp.ne.s32.totalorder %s103, %s106
    %p115 = scmp.eq.s32.totalorder %s18, 3
    %p116 = por %p114, %p115
    %p117 = scmp.ne.s32.totalorder %s106, %s107
    %p118 = scmp.eq.s32.totalorder %s18, 0
    %p119 = por %p117, %p118
    %p120 = scmp.ne.s32.totalorder %s106, %s107
    %p121 = scmp.eq.s32.totalorder %s19, 3
    %p122 = por %p120, %p121
    %p124 = scmp.ne.s32.totalorder %s107, %s123
    %p125 = scmp.eq.s32.totalorder %s19, 0
    %p126 = por %p124, %p125
    %s127 = ssub.s32 %s21, %s28
    %p128 = scmp.eq.s32.totalorder %s127, 0
    %s130 = sadd.s32 %s129, 1
    %s131 = scalar_select %p128, %s129, %s130
    %p134 = pneg %p128
    %p135 = scmp.eq.s32.totalorder %s13, 3
    %p136 = por %p134, %p135
    %p137 = scmp.ne.s32.totalorder %s129, %s132
    %p138 = scmp.eq.s32.totalorder %s13, 0
    %p139 = por %p137, %p138
    %p140 = scmp.ne.s32.totalorder %s129, %s132
    %p141 = scmp.eq.s32.totalorder %s18, 3
    %p142 = por %p140, %p141
    %p143 = scmp.ne.s32.totalorder %s132, %s133
    %p144 = scmp.eq.s32.totalorder %s18, 0
    %p145 = por %p143, %p144
    %p146 = scmp.ne.s32.totalorder %s132, %s133
    %p147 = scmp.eq.s32.totalorder %s19, 3
    %p148 = por %p146, %p147
    %p150 = scmp.ne.s32.totalorder %s133, %s149
    %p151 = scmp.eq.s32.totalorder %s19, 0
    %p152 = por %p150, %p151
    %s154 = sadd.s32 %s153, 1
    %p157 = scmp.eq.s32.totalorder %s13, 3
    %p158 = scmp.ne.s32.totalorder %s153, %s155
    %p159 = scmp.eq.s32.totalorder %s13, 0
    %p160 = por %p158, %p159
    %p161 = scmp.ne.s32.totalorder %s153, %s155
    %p162 = scmp.eq.s32.totalorder %s18, 3
    %p163 = por %p161, %p162
    %p164 = scmp.ne.s32.totalorder %s155, %s156
    %p165 = scmp.eq.s32.totalorder %s18, 0
    %p166 = por %p164, %p165
    %p167 = scmp.ne.s32.totalorder %s155, %s156
    %p168 = scmp.eq.s32.totalorder %s19, 3
    %p169 = por %p167, %p168
    %p171 = scmp.ne.s32.totalorder %s156, %s170
    %p172 = scmp.eq.s32.totalorder %s19, 0
    %p173 = por %p171, %p172
    %s175 = sadd.s32 %s174, 1
    %p178 = scmp.eq.s32.totalorder %s13, 3
    %p179 = scmp.ne.s32.totalorder %s174, %s176
    %p180 = scmp.eq.s32.totalorder %s13, 0
    %p181 = por %p179, %p180
    %p182 = scmp.ne.s32.totalorder %s174, %s176
    %p183 = scmp.eq.s32.totalorder %s18, 3
    %p184 = por %p182, %p183
    %p185 = scmp.ne.s32.totalorder %s176, %s177
    %p186 = scmp.eq.s32.totalorder %s18, 0
    %p187 = por %p185, %p186
    %p188 = scmp.ne.s32.totalorder %s176, %s177
    %p189 = scmp.eq.s32.totalorder %s19, 3
    %p190 = por %p188, %p189
    %p192 = scmp.ne.s32.totalorder %s177, %s191
    %p193 = scmp.eq.s32.totalorder %s19, 0
    %p194 = por %p192, %p193
    %s195 = ssub.s32 %s20, %s32
    %p196 = scmp.eq.s32.totalorder %s195, 0
    %s198 = sadd.s32 %s197, 1
    %s199 = scalar_select %p196, %s197, %s198
    %p202 = pneg %p196
    %p203 = scmp.eq.s32.totalorder %s13, 3
    %p204 = por %p202, %p203
    %p205 = scmp.ne.s32.totalorder %s197, %s200
    %p206 = scmp.eq.s32.totalorder %s13, 0
    %p207 = por %p205, %p206
    %p208 = scmp.ne.s32.totalorder %s197, %s200
    %p209 = scmp.eq.s32.totalorder %s18, 3
    %p210 = por %p208, %p209
    %p211 = scmp.ne.s32.totalorder %s200, %s201
    %p212 = scmp.eq.s32.totalorder %s18, 0
    %p213 = por %p211, %p212
    %p214 = scmp.ne.s32.totalorder %s200, %s201
    %p215 = scmp.eq.s32.totalorder %s19, 3
    %p216 = por %p214, %p215
    %p218 = scmp.ne.s32.totalorder %s201, %s217
    %p219 = scmp.eq.s32.totalorder %s19, 0
    %p220 = por %p218, %p219
    %p221 = scmp.le.s32.totalorder 1, %s13
    %p222 = scmp.lt.s32.totalorder %s13, 5
    %p223 = pnand %p221, %p222
    %p224 = pneg %p223
    // Predicated region
    $region9: #{esm_decoder_full_moe.9} parent=5 // pred_check
      _
    $region10: #{esm_decoder_full_moe.9} parent=5 // pred_check_branch
      %226 = sbr.rel (%p223) target = $region12
    $region11: #{esm_decoder_full_moe.9} parent=5 // pred_region
      %s227 = ssub.s32 %s13, 1
      // Predicated region
      $region13: #{esm_decoder_full_moe.9} parent=11 // pred_check
        %p228 = pneg %p51
      $region14: #{esm_decoder_full_moe.9} parent=11 // pred_check_branch
        %230 = sbr.rel (%p228) target = $region16
      $region15: #{esm_decoder_full_moe.9} parent=11 // pred_region
        %s231 = smul.u32 2, %s22
        %p232 = scmp.lt.s32.totalorder %s231, 1
        %s233 = scalar_select %p232, %s231, 1
        %s234 = smul.addr %s233, 8
        %s235 = scalar_lea.vmem %s0, %s234
        %s236 = smul.u32 2, %s22
      $region16: #{esm_decoder_full_moe.9} parent=11 // pred_fallthru
        _
      // Predicated region
      $region17: #{esm_decoder_full_moe.9} parent=11 // pred_check
        %p237 = pneg %p72
      $region18: #{esm_decoder_full_moe.9} parent=11 // pred_check_branch
        %239 = sbr.rel (%p237) target = $region20
      $region19: #{esm_decoder_full_moe.9} parent=11 // pred_region
        _
      $region20: #{esm_decoder_full_moe.9} parent=11 // pred_fallthru
        _
      // Predicated region
      $region21: #{esm_decoder_full_moe.9} parent=11 // pred_check
        %p240 = pneg %p93
      $region22: #{esm_decoder_full_moe.9} parent=11 // pred_check_branch
        %242 = sbr.rel (%p240) target = $region24
      $region23: #{esm_decoder_full_moe.9} parent=11 // pred_region
        _
      $region24: #{esm_decoder_full_moe.9} parent=11 // pred_fallthru
        _
      // Predicated region
      $region25: #{esm_decoder_full_moe.9} parent=11 // pred_check
        %p243 = pneg %p166
      $region26: #{esm_decoder_full_moe.9} parent=11 // pred_check_branch
        %245 = sbr.rel (%p243) target = $region28
      $region27: #{esm_decoder_full_moe.9} parent=11 // pred_region
        _
      $region28: #{esm_decoder_full_moe.9} parent=11 // pred_fallthru
        _
      // Predicated region
      $region29: #{esm_decoder_full_moe.9} parent=11 // pred_check
        %p246 = pneg %p187
      $region30: #{esm_decoder_full_moe.9} parent=11 // pred_check_branch
        %248 = sbr.rel (%p246) target = $region32
      $region31: #{esm_decoder_full_moe.9} parent=11 // pred_region
        _
      $region32: #{esm_decoder_full_moe.9} parent=11 // pred_fallthru
        _
    $region12: #{esm_decoder_full_moe.9} parent=5 // pred_fallthru
      _
    %p249 = scmp.lt.s32.totalorder %s13, 4
    // Predicated region
    $region33: #{esm_decoder_full_moe.9} parent=5 // pred_check
      %p250 = pneg %p249
    $region34: #{esm_decoder_full_moe.9} parent=5 // pred_check_branch
      %252 = sbr.rel (%p250) target = $region36
    $region35: #{esm_decoder_full_moe.9} parent=5 // pred_region
      // Predicated region
      $region37: #{esm_decoder_full_moe.9} parent=35 // pred_check
        %p253 = pneg %p113
      $region38: #{esm_decoder_full_moe.9} parent=35 // pred_check_branch
        %255 = sbr.rel (%p253) target = $region40
      $region39: #{esm_decoder_full_moe.9} parent=35 // pred_region
        %p256 = scmp.lt.s32.totalorder %s21, 3
        %s257 = scalar_select %p256, %s21, 3
        %s258 = smul.addr %s257, 4
        %s259 = smul.addr %s258, 4
        %s260 = scalar_lea.vmem %s3, %s259
      $region40: #{esm_decoder_full_moe.9} parent=35 // pred_fallthru
        _
      // Predicated region
      $region41: #{esm_decoder_full_moe.9} parent=35 // pred_check
        %p261 = pneg %p139
      $region42: #{esm_decoder_full_moe.9} parent=35 // pred_check_branch
        %263 = sbr.rel (%p261) target = $region44
      $region43: #{esm_decoder_full_moe.9} parent=35 // pred_region
        %p264 = scmp.lt.s32.totalorder %s21, 3
        %s265 = scalar_select %p264, %s21, 3
        %s266 = scalar_lea.vmem %s4, %s265
      $region44: #{esm_decoder_full_moe.9} parent=35 // pred_fallthru
        _
    $region36: #{esm_decoder_full_moe.9} parent=5 // pred_fallthru
      _
    %p267 = scmp.le.s32.totalorder 1, %s13
    %p268 = scmp.lt.s32.totalorder %s13, 5
    %p269 = pnand %p267, %p268
    %p270 = pneg %p269
    // Predicated region
    $region45: #{esm_decoder_full_moe.9} parent=5 // pred_check
      _
    $region46: #{esm_decoder_full_moe.9} parent=5 // pred_check_branch
      %272 = sbr.rel (%p269) target = $region48
    $region47: #{esm_decoder_full_moe.9} parent=5 // pred_region
      %s273 = ssub.s32 %s13, 1
      %s274 = smul.u32 2, %s22
      %p275 = scmp.lt.s32.totalorder %s274, 1
      %s276 = scalar_select %p275, %s274, 1
      %s277 = smul.addr %s276, 8
      %s278 = scalar_lea.vmem %s0, %s277
      %p279 = pneg %p51
      %p280 = pneg %p48
      %p281 = pneg %p72
      %p282 = pneg %p69
      %p283 = pneg %p93
      %p284 = pneg %p90
      %p285 = scmp.lt.s32.totalorder %s23, 3
      %s286 = scalar_select %p285, %s23, 3
      %s287 = smul.addr %s286, 4
      %s288 = smul.addr %s287, 4
      %s289 = scalar_lea.vmem %s3, %s288
      %p290 = pneg %p119
      %p291 = pneg %p116
      %p292 = scmp.lt.s32.totalorder %s23, 3
      %s293 = scalar_select %p292, %s23, 3
      %s294 = scalar_lea.vmem %s4, %s293
      %p295 = pneg %p145
      %p296 = pneg %p142
      %p297 = pneg %p166
      %p298 = pneg %p163
      %p299 = pneg %p187
      %p300 = pneg %p184
      %p301 = pneg %p213
      %p302 = pneg %p210
      %s303 = smul.u32 2, %s22
      %p304 = scmp.lt.s32.totalorder %s303, 1
      %s305 = scalar_select %p304, %s303, 1
      %s306 = smul.addr %s305, 8
      %s307 = scalar_lea.vmem %s7, %s306
      %s308 = smul.u32 2, %s22
      %p309 = scmp.lt.s32.totalorder %s308, 1
      %s310 = scalar_select %p309, %s308, 1
      %s311 = smul.addr %s310, 8
      %s312 = scalar_lea.vmem %s0, %s311
      %s313 = smul.u32 2, %s22
      %p314 = scmp.lt.s32.totalorder %s23, 3
      %s315 = scalar_select %p314, %s23, 3
      %s316 = smul.addr %s315, 4
      %s317 = smul.addr %s316, 4
      %s318 = scalar_lea.vmem %s3, %s317
      %p319 = scmp.lt.s32.totalorder %s23, 3
      %s320 = scalar_select %p319, %s23, 3
      %s321 = scalar_lea.vmem %s4, %s320
      %s322 = smul.u32 2, %s22
      %p323 = scmp.lt.s32.totalorder %s322, 1
      %s324 = scalar_select %p323, %s322, 1
      %s325 = smul.addr %s324, 8
      %s326 = scalar_lea.vmem %s7, %s325
      %s327 = smul.u32 2, %s22
      %v329 = vld [vmem:[%s312] sm:$0xff]
      %v330 = vld [vmem:[%s312 + $0x8] sm:$0xff]
      %v331 = vpack.c.bf16 %v330, %v329
      %p332 = scmp.eq.s32.totalorder %s23, 0
      // Predicated region
      $region49: #{esm_decoder_full_moe.9} parent=47 // pred_check
        %p333 = pneg %p332
      $region50: #{esm_decoder_full_moe.9} parent=47 // pred_check_branch
        %335 = sbr.rel (%p333) target = $region52
      $region51: #{esm_decoder_full_moe.9} parent=47 // pred_region
        %vm336 = vcmask 261120
        %337 = vst.msk [vmem:[#allocation2] sm:$0xff] %vm336, 0.0
        %338 = vst.msk [vmem:[#allocation2 + $0x8] sm:$0xff] %vm336, 0.0
      $region52: #{esm_decoder_full_moe.9} parent=47 // pred_fallthru
        _
      %v339 = vld [vmem:[%s1] sm:$0xf]
      %v340 = vld [vmem:[%s1 + $0x4] sm:$0xf]
      %v341 = vld [vmem:[%s1 + $0x8] sm:$0xf]
      %v342 = vld [vmem:[%s1 + $0xc] sm:$0xf]
      %v343 = vld [vmem:[%s2] sm:$0x1]
      %v345 = vlaneseq
      %v346 = vshrl.u32 %v345, 7
      %v347 = vsub.s32 0, %v346
      %v348 = vrot.slane %v343, %v347
      %v354 = vunpack.c.l.b16 %v339
      %v355 = vunpack.c.l.b16 %v340
      %v356 = vunpack.c.l.b16 %v341
      %v357 = vunpack.c.l.b16 %v342
      %v358 = vpack.c.b16 %v355, %v354
      %v359 = vpack.c.b16 %v357, %v356
      %vm362 = vcmask 261120
      %v364 = vsel %vm362, %v331, 0
      %366 = vmatprep.subr.bf16.mxu0 0
      %367 = vmatpush1.bf16.msra.mxu0 0
      %368 = vmatprep.subr.bf16.mxu0 0
      %369 = vmatpush1.bf16.msra.mxu0 0
      %370 = vmatprep.subr.bf16.mxu0 0
      %371 = vmatpush1.bf16.msra.mxu0 0
      %372 = vmatprep.subr.bf16.mxu0 0
      %373 = vmatpush1.bf16.msra.mxu0 0
      %374 = vmatprep.subr.bf16.mxu0 0
      %375 = vmatpush1.bf16.msra.mxu0 0
      %376 = vmatprep.subr.bf16.mxu0 0
      %377 = vmatpush1.bf16.msra.mxu0 0
      %378 = vmatprep.subr.bf16.mxu0 0
      %379 = vmatpush1.bf16.msra.mxu0 %v359
      %380 = vmatprep.subr.bf16.mxu0 0
      %381 = vmatpush1.bf16.msra.mxu0 %v358
      %382 = vmatprep.subr.bf16.mxu0 0
      %383 = vmatpush2.bf16.msra.mxu0 0
      %384 = vmatprep.subr.bf16.mxu0 0
      %385 = vmatpush2.bf16.msra.mxu0 0
      %386 = vmatprep.subr.bf16.mxu0 0
      %387 = vmatpush2.bf16.msra.mxu0 0
      %388 = vmatprep.subr.bf16.mxu0 0
      %389 = vmatpush2.bf16.msra.mxu0 0
      %390 = vmatprep.subr.bf16.mxu0 0
      %391 = vmatpush2.bf16.msra.mxu0 0
      %392 = vmatprep.subr.bf16.mxu0 0
      %393 = vmatpush2.bf16.msra.mxu0 0
      %394 = vmatprep.subr.bf16.mxu0 0
      %395 = vmatpush2.bf16.msra.mxu0 0
      %396 = vmatprep.subr.bf16.mxu0 0
      %397 = vmatpush2.bf16.msra.mxu0 0
      %398 = vmatprep.mubr.bf16.mxu0 0
      %399 = vmatmul.mubr.bf16.gmra.mxu0 %v364
      %v400 = vpop.f32.mrf.mxu0
      %v401 = vadd.f32 %v348, %v400
      %v402 = vpop.f32.mrf.mxu0
      %v403 = vpop.f32.mrf.mxu0
      %v404 = vadd.f32 %v348, %v403
      %v405 = vpop.f32.mrf.mxu0
      %406 = vdwg.mxu0
      %v407 = vlaneseq
      %v408 = vand.u32 %v407, 127
      %v409 = vstv %s23
      %vm410 = vcmp.eq.s32.totalorder %v408, %v409
      %v411 = vsel %vm410, %v401, 0.0
      %v412 = vsel %vm410, %v404, 0.0
      %vm413 = vcmask 31744
      %v414 = vsel %vm413, %v411, 0.0
      %415 = vadd.xlane.f32.xlu0 %v414
      %v416 = vpop.xlane.xlu0 %415
      %v417 = vsel %vm413, %v412, 0.0
      %418 = vadd.xlane.f32.xlu0 %v417
      %v419 = vpop.xlane.xlu0 %418
      %vm420 = vcmp.gt.f32.partialorder %v401, %v416
      %vm421 = vcmp.gt.f32.partialorder %v404, %v419
      %vm422 = vcmp.eq.f32.partialorder %v401, %v416
      %vm423 = vcmp.eq.f32.partialorder %v404, %v419
      %vm424 = vcmp.lt.s32.totalorder %v408, %v409
      %vm425 = vmand %vm422, %vm424
      %vm426 = vmand %vm423, %vm424
      %vm427 = vmor %vm420, %vm425
      %vm428 = vmor %vm421, %vm426
      %v429 = vsel %vm427, 1, 0
      %v430 = vsel %vm428, 1, 0
      %v431 = vsel %vm413, %v429, 0
      %v432 = vand.u32 %v431, 65535
      %v433 = vshrl.u32 %v431, 16
      %v434 = vcvt.s32.f32 %v432
      %v435 = vcvt.s32.f32 %v433
      %436 = vadd.xlane.f32.xlu0 %v434
      %v437 = vpop.xlane.xlu0 %436
      %438 = vadd.xlane.f32.xlu0 %v435
      %v439 = vpop.xlane.xlu0 %438
      %v440 = vcvt.f32.s32 %v437
      %v441 = vcvt.f32.s32 %v439
      %v442 = vshll.u32 %v441, 16
      %v443 = vadd.s32 %v442, %v440
      %v444 = vsel %vm413, %v430, 0
      %v445 = vand.u32 %v444, 65535
      %v446 = vshrl.u32 %v444, 16
      %v447 = vcvt.s32.f32 %v445
      %v448 = vcvt.s32.f32 %v446
      %449 = vadd.xlane.f32.xlu0 %v447
      %v450 = vpop.xlane.xlu0 %449
      %451 = vadd.xlane.f32.xlu0 %v448
      %v452 = vpop.xlane.xlu0 %451
      %v453 = vcvt.f32.s32 %v450
      %v454 = vcvt.f32.s32 %v452
      %v455 = vshll.u32 %v454, 16
      %v456 = vadd.s32 %v455, %v453
      %vm457 = vcmp.lt.s32.totalorder %v443, 2
      %vm458 = vcmp.lt.s32.totalorder %v456, 2
      %v459 = vsel %vm457, 1, 0
      %v460 = vsel %vm458, 1, 0
      %v461 = vcvt.s32.f32 %v459
      %v462 = vcvt.s32.f32 %v460
      %v463 = vld [vmem:[%s318] sm:$0xf]
      %v464 = vld [vmem:[%s318 + $0x4] sm:$0xf]
      %v465 = vld [vmem:[%s318 + $0x8] sm:$0xf]
      %v466 = vld [vmem:[%s318 + $0xc] sm:$0xf]
      %v467 = vld [vmem:[%s321] sm:$0x1]
      %v469 = vlaneseq
      %v470 = vshrl.u32 %v469, 7
      %v471 = vsub.s32 0, %v470
      %v472 = vrot.slane %v467, %v471
      %v478 = vunpack.c.l.b16 %v463
      %v479 = vunpack.c.l.b16 %v464
      %v480 = vunpack.c.l.b16 %v465
      %v481 = vunpack.c.l.b16 %v466
      %v482 = vpack.c.b16 %v479, %v478
      %v483 = vpack.c.b16 %v481, %v480
      %486 = vmatprep.subr.bf16.mxu0 0
      %487 = vmatpush1.bf16.msra.mxu0 0
      %488 = vmatprep.subr.bf16.mxu0 0
      %489 = vmatpush1.bf16.msra.mxu0 0
      %490 = vmatprep.subr.bf16.mxu0 0
      %491 = vmatpush1.bf16.msra.mxu0 0
      %492 = vmatprep.subr.bf16.mxu0 0
      %493 = vmatpush1.bf16.msra.mxu0 0
      %494 = vmatprep.subr.bf16.mxu0 0
      %495 = vmatpush1.bf16.msra.mxu0 0
      %496 = vmatprep.subr.bf16.mxu0 0
      %497 = vmatpush1.bf16.msra.mxu0 0
      %498 = vmatprep.subr.bf16.mxu0 0
      %499 = vmatpush1.bf16.msra.mxu0 %v483
      %500 = vmatprep.subr.bf16.mxu0 0
      %501 = vmatpush1.bf16.msra.mxu0 %v482
      %502 = vmatprep.subr.bf16.mxu0 0
      %503 = vmatpush2.bf16.msra.mxu0 0
      %504 = vmatprep.subr.bf16.mxu0 0
      %505 = vmatpush2.bf16.msra.mxu0 0
      %506 = vmatprep.subr.bf16.mxu0 0
      %507 = vmatpush2.bf16.msra.mxu0 0
      %508 = vmatprep.subr.bf16.mxu0 0
      %509 = vmatpush2.bf16.msra.mxu0 0
      %510 = vmatprep.subr.bf16.mxu0 0
      %511 = vmatpush2.bf16.msra.mxu0 0
      %512 = vmatprep.subr.bf16.mxu0 0
      %513 = vmatpush2.bf16.msra.mxu0 0
      %514 = vmatprep.subr.bf16.mxu0 0
      %515 = vmatpush2.bf16.msra.mxu0 0
      %516 = vmatprep.subr.bf16.mxu0 0
      %517 = vmatpush2.bf16.msra.mxu0 0
      %518 = vmatprep.mubr.bf16.mxu0 0
      %519 = vmatmul.mubr.bf16.gmra.mxu0 %v364
      %v520 = vpop.f32.mrf.mxu0
      %v521 = vadd.f32 %v472, %v520
      %v522 = vpop.f32.mrf.mxu0
      %v523 = vpop.f32.mrf.mxu0
      %v524 = vadd.f32 %v472, %v523
      %v525 = vpop.f32.mrf.mxu0
      %526 = vdwg.mxu0
      %v527 = vld [vmem:[#allocation2] sm:$0xff]
      %v528 = vld [vmem:[#allocation2 + $0x8] sm:$0xff]
      %v529 = vmul.f32 %v461, %v521
      %v530 = vmul.f32 %v462, %v524
      %v531 = vadd.f32 %v527, %v529
      %v532 = vadd.f32 %v528, %v530
      %533 = vst.msk [vmem:[#allocation2] sm:$0xff] %vm362, %v531
      %534 = vst.msk [vmem:[#allocation2 + $0x8] sm:$0xff] %vm362, %v532
      %p535 = scmp.eq.s32.totalorder %s23, 3
      // Predicated region
      $region53: #{esm_decoder_full_moe.9} parent=47 // pred_check
        %p536 = pneg %p535
      $region54: #{esm_decoder_full_moe.9} parent=47 // pred_check_branch
        %538 = sbr.rel (%p536) target = $region56
      $region55: #{esm_decoder_full_moe.9} parent=47 // pred_region
        %v539 = vld [vmem:[#allocation2] sm:$0xff]
        %v540 = vld [vmem:[#allocation2 + $0x8] sm:$0xff]
        %v541 = vadd.f32 %v329, %v539
        %v542 = vadd.f32 %v330, %v540
        %v543 = vsel %vm362, %v541, 0.0
        %544 = vadd.xlane.f32.xlu0 %v543
        %v545 = vpop.xlane.xlu0 %544
        %v546 = vsel %vm362, %v542, 0.0
        %547 = vadd.xlane.f32.xlu0 %v546
        %v548 = vpop.xlane.xlu0 %547
        %v549 = vrcp.pop 32.0
        %v550 = vmul.f32 %v545, %v549
        %v551 = vmul.f32 %v548, %v549
        %v552 = vsub.f32 %v541, %v550
        %v553 = vsub.f32 %v542, %v551
        %v554 = vmul.f32 %v552, %v552
        %v555 = vmul.f32 %v553, %v553
        %v556 = vsel %vm362, %v554, 0.0
        %557 = vadd.xlane.f32.xlu0 %v556
        %v558 = vpop.xlane.xlu0 %557
        %v559 = vsel %vm362, %v555, 0.0
        %560 = vadd.xlane.f32.xlu0 %v559
        %v561 = vpop.xlane.xlu0 %560
        %v562 = vmul.f32 %v558, %v549
        %v563 = vmul.f32 %v561, %v549
        %v564 = vadd.f32 %v562, 1e-05
        %v565 = vadd.f32 %v563, 1e-05
        %v566 = vrsqrt.pop %v564
        %v567 = vrsqrt.pop %v565
        %v568 = vmul.f32 %v552, %v566
        %v569 = vmul.f32 %v553, %v567
        %v570 = vld [vmem:[%s5] sm:$0x1]
        %v572 = vlaneseq
        %v573 = vshrl.u32 %v572, 7
        %v574 = vsub.s32 0, %v573
        %v575 = vrot.slane %v570, %v574
        %v577 = vmul.f32 %v568, %v575
        %v578 = vmul.f32 %v569, %v575
        %v579 = vld [vmem:[%s6] sm:$0x1]
        %v581 = vlaneseq
        %v582 = vshrl.u32 %v581, 7
        %v583 = vsub.s32 0, %v582
        %v584 = vrot.slane %v579, %v583
        %v586 = vadd.f32 %v577, %v584
        %v587 = vadd.f32 %v578, %v584
        %588 = vst.msk [vmem:[%s326] sm:$0xff] %vm362, %v586
        %589 = vst.msk [vmem:[%s326 + $0x8] sm:$0xff] %vm362, %v587
      $region56: #{esm_decoder_full_moe.9} parent=47 // pred_fallthru
        _
      %s590 = smul.u32 2, %s22
      %p591 = scmp.lt.s32.totalorder %s590, 1
      %s592 = scalar_select %p591, %s590, 1
      %s593 = smul.addr %s592, 8
      %s594 = scalar_lea.vmem %s7, %s593
      // Predicated region
      $region57: #{esm_decoder_full_moe.9} parent=47 // pred_check
        %p595 = pneg %p210
      $region58: #{esm_decoder_full_moe.9} parent=47 // pred_check_branch
        %597 = sbr.rel (%p595) target = $region60
      $region59: #{esm_decoder_full_moe.9} parent=47 // pred_region
        %s598 = smul.u32 2, %s22
      $region60: #{esm_decoder_full_moe.9} parent=47 // pred_fallthru
        _
      // Predicated region
      $region61: #{esm_decoder_full_moe.9} parent=47 // pred_check
        %p599 = pneg %p210
      $region62: #{esm_decoder_full_moe.9} parent=47 // pred_check_branch
        %601 = sbr.rel (%p599) target = $region64
      $region63: #{esm_decoder_full_moe.9} parent=47 // pred_region
        %s602 = smul.u32 2, %s22
        %p603 = scmp.lt.s32.totalorder %s602, 1
        %s604 = scalar_select %p603, %s602, 1
        %s605 = smul.addr %s604, 8
        %s606 = scalar_lea.vmem %s7, %s605
      $region64: #{esm_decoder_full_moe.9} parent=47 // pred_fallthru
        _
    $region48: #{esm_decoder_full_moe.9} parent=5 // pred_fallthru
      _
    %p607 = scmp.le.s32.totalorder 2, %s13
    // Predicated region
    $region65: #{esm_decoder_full_moe.9} parent=5 // pred_check
      %p608 = pneg %p607
    $region66: #{esm_decoder_full_moe.9} parent=5 // pred_check_branch
      %610 = sbr.rel (%p608) target = $region68
    $region67: #{esm_decoder_full_moe.9} parent=5 // pred_region
      %s611 = ssub.s32 %s13, 2
    $region68: #{esm_decoder_full_moe.9} parent=5 // pred_fallthru
      _
  $region6: #{esm_decoder_full_moe.9} parent=0 // loop_footer
    %s17 = sadd.s32 1, %s13
  $region7: #{esm_decoder_full_moe.9} parent=0 // loop_footer_branch
    %12 = sbr.rel target = $region3
  $region8: #{esm_decoder_full_moe.9} parent=0 // loop_exit
    _

// kernel: esm_decoder_full_moe.7
$region0: #{esm_decoder_full_moe.7}
  #allocation0 [shape = 'u32[]', space=smem, size = 0x4, offset = 0x4, fixed_abs, tag = 'smem constant byte address 0x4 - core index']
  #allocation1 [shape = 'u32[144,128]{1,0:T(1,128)}', space=vmem, size = 0x12000, scoped, tag = 'internal scratch']
  %s0 = inlined_call_operand.vmem [shape: f32[2,8,32], index: 0, kind: input, shape index: {}, may-alias: {0,1}]
  %s1 = inlined_call_operand.vmem [shape: f32[2,8,32], index: 1, kind: input, shape index: {}, may-alias: {0,1}]
  %s2 = inlined_call_operand.vmem [shape: bf16[32,32], index: 2, kind: input, shape index: {}]
  %s3 = inlined_call_operand.vmem [shape: f32[1,32], index: 3, kind: input, shape index: {}]
  %s4 = inlined_call_operand.vmem [shape: bf16[32,64], index: 4, kind: input, shape index: {}]
  %s5 = inlined_call_operand.vmem [shape: f32[1,64], index: 5, kind: input, shape index: {}]
  %s6 = inlined_call_operand.vmem [shape: bf16[32,32], index: 6, kind: input, shape index: {}]
  %s7 = inlined_call_operand.vmem [shape: f32[1,32], index: 7, kind: input, shape index: {}]
  %s8 = inlined_call_operand.vmem [shape: f32[1,32], index: 8, kind: input, shape index: {}]
  %s9 = inlined_call_operand.vmem [shape: f32[1,32], index: 9, kind: input, shape index: {}]
  %s10 = inlined_call_operand.vmem [shape: f32[2,8,32], index: 10, kind: output, shape index: {}]
  %s11 = sld [smem:[#allocation0]]
  $region73: #{esm_decoder_full_moe.7} parent=0
    _
  %s13 = ssub.s32 1, %s11
  %s14 = scalar_select 0, %s13, %s11
  loop: start=0, step=1, limit=4
  $region2: #{esm_decoder_full_moe.7} parent=0 // loop_pre_header
    _
  $region3: #{esm_decoder_full_moe.7} parent=0 // loop_header
    %s16 = sphi 0, %s20
    %p17 = scmp.ge.s32.totalorder %s16, 4
    %s23 = sphi 0, %s35
    %s24 = sphi 0, %s31
    %s25 = sphi 0, %s23
    %s26 = sphi 0, %s24
    %s27 = sphi 0, %s25
    %s28 = sphi 0, %s26
    %s40 = sphi 0, %s42
    %s43 = sphi 0, %s40
    %s44 = sphi 0, %s43
    %s60 = sphi 0, %s44
    %s66 = sphi 0, %s68
    %s69 = sphi 0, %s66
    %s70 = sphi 0, %s69
    %s86 = sphi 0, %s70
    %s90 = sphi 0, %s90
    %s92 = sphi 0, %s90
    %s93 = sphi 0, %s92
    %s107 = sphi 0, %s93
    %s111 = sphi 0, %s111
    %s113 = sphi 0, %s111
    %s114 = sphi 0, %s113
    %s128 = sphi 0, %s114
    %s132 = sphi 0, %s132
    %s134 = sphi 0, %s132
    %s135 = sphi 0, %s134
    %s149 = sphi 0, %s135
    %s153 = sphi 0, %s153
    %s155 = sphi 0, %s153
    %s156 = sphi 0, %s155
    %s170 = sphi 0, %s156
    %s174 = sphi 0, %s174
    %s176 = sphi 0, %s174
    %s177 = sphi 0, %s176
    %s191 = sphi 0, %s177
    %s195 = sphi 0, %s195
    %s197 = sphi 0, %s195
    %s198 = sphi 0, %s197
    %s212 = sphi 0, %s198
    %s216 = sphi 0, %s216
    %s218 = sphi 0, %s216
    %s219 = sphi 0, %s218
    %s233 = sphi 0, %s219
    %s237 = sphi 0, %s237
    %s239 = sphi 0, %s237
    %s240 = sphi 0, %s239
    %s254 = sphi 0, %s240
    %s262 = sphi 0, %s264
    %s265 = sphi 0, %s262
    %s266 = sphi 0, %s265
    %s282 = sphi 0, %s266
  $region4: #{esm_decoder_full_moe.7} parent=0 // loop_header_branch
    %19 = sbr.rel (%p17) target = $region8
  $region5: #{esm_decoder_full_moe.7} parent=0 // loop_body
    %s21 = ssub.s32 %s16, 1
    %s22 = ssub.s32 %s16, 2
    %s29 = sadd.s32 1, %s24
    %p30 = scmp.ge.s32.totalorder %s29, 1
    %s31 = scalar_select %p30, 0, %s29
    %s32 = sadd.s32 1, %s23
    %s33 = scalar_select %p30, %s32, %s23
    %p34 = scmp.ge.s32.totalorder %s33, 2
    %s35 = scalar_select %p34, 0, %s33
    %s36 = ssub.s32 %s23, %s35
    %s37 = ssub.s32 %s24, %s31
    %s38 = sor.u32 %s36, %s37
    %p39 = scmp.eq.s32.totalorder %s38, 0
    %s41 = sadd.s32 %s40, 1
    %s42 = scalar_select %p39, %s40, %s41
    %p45 = pneg %p39
    %p46 = scmp.eq.s32.totalorder %s16, 1
    %p47 = por %p45, %p46
    %p48 = scmp.ne.s32.totalorder %s40, %s43
    %p49 = scmp.eq.s32.totalorder %s16, 0
    %p50 = por %p48, %p49
    %p51 = scmp.ne.s32.totalorder %s40, %s43
    %p52 = scmp.eq.s32.totalorder %s21, 1
    %p53 = por %p51, %p52
    %p54 = scmp.ne.s32.totalorder %s43, %s44
    %p55 = scmp.eq.s32.totalorder %s21, 0
    %p56 = por %p54, %p55
    %p57 = scmp.ne.s32.totalorder %s43, %s44
    %p58 = scmp.eq.s32.totalorder %s22, 1
    %p59 = por %p57, %p58
    %p61 = scmp.ne.s32.totalorder %s44, %s60
    %p62 = scmp.eq.s32.totalorder %s22, 0
    %p63 = por %p61, %p62
    %s64 = ssub.s32 %s23, %s35
    %p65 = scmp.eq.s32.totalorder %s64, 0
    %s67 = sadd.s32 %s66, 1
    %s68 = scalar_select %p65, %s66, %s67
    %p71 = pneg %p65
    %p72 = scmp.eq.s32.totalorder %s16, 1
    %p73 = por %p71, %p72
    %p74 = scmp.ne.s32.totalorder %s66, %s69
    %p75 = scmp.eq.s32.totalorder %s16, 0
    %p76 = por %p74, %p75
    %p77 = scmp.ne.s32.totalorder %s66, %s69
    %p78 = scmp.eq.s32.totalorder %s21, 1
    %p79 = por %p77, %p78
    %p80 = scmp.ne.s32.totalorder %s69, %s70
    %p81 = scmp.eq.s32.totalorder %s21, 0
    %p82 = por %p80, %p81
    %p83 = scmp.ne.s32.totalorder %s69, %s70
    %p84 = scmp.eq.s32.totalorder %s22, 1
    %p85 = por %p83, %p84
    %p87 = scmp.ne.s32.totalorder %s70, %s86
    %p88 = scmp.eq.s32.totalorder %s22, 0
    %p89 = por %p87, %p88
    %s91 = sadd.s32 %s90, 1
    %p94 = scmp.eq.s32.totalorder %s16, 1
    %p95 = scmp.ne.s32.totalorder %s90, %s92
    %p96 = scmp.eq.s32.totalorder %s16, 0
    %p97 = por %p95, %p96
    %p98 = scmp.ne.s32.totalorder %s90, %s92
    %p99 = scmp.eq.s32.totalorder %s21, 1
    %p100 = por %p98, %p99
    %p101 = scmp.ne.s32.totalorder %s92, %s93
    %p102 = scmp.eq.s32.totalorder %s21, 0
    %p103 = por %p101, %p102
    %p104 = scmp.ne.s32.totalorder %s92, %s93
    %p105 = scmp.eq.s32.totalorder %s22, 1
    %p106 = por %p104, %p105
    %p108 = scmp.ne.s32.totalorder %s93, %s107
    %p109 = scmp.eq.s32.totalorder %s22, 0
    %p110 = por %p108, %p109
    %s112 = sadd.s32 %s111, 1
    %p115 = scmp.eq.s32.totalorder %s16, 1
    %p116 = scmp.ne.s32.totalorder %s111, %s113
    %p117 = scmp.eq.s32.totalorder %s16, 0
    %p118 = por %p116, %p117
    %p119 = scmp.ne.s32.totalorder %s111, %s113
    %p120 = scmp.eq.s32.totalorder %s21, 1
    %p121 = por %p119, %p120
    %p122 = scmp.ne.s32.totalorder %s113, %s114
    %p123 = scmp.eq.s32.totalorder %s21, 0
    %p124 = por %p122, %p123
    %p125 = scmp.ne.s32.totalorder %s113, %s114
    %p126 = scmp.eq.s32.totalorder %s22, 1
    %p127 = por %p125, %p126
    %p129 = scmp.ne.s32.totalorder %s114, %s128
    %p130 = scmp.eq.s32.totalorder %s22, 0
    %p131 = por %p129, %p130
    %s133 = sadd.s32 %s132, 1
    %p136 = scmp.eq.s32.totalorder %s16, 1
    %p137 = scmp.ne.s32.totalorder %s132, %s134
    %p138 = scmp.eq.s32.totalorder %s16, 0
    %p139 = por %p137, %p138
    %p140 = scmp.ne.s32.totalorder %s132, %s134
    %p141 = scmp.eq.s32.totalorder %s21, 1
    %p142 = por %p140, %p141
    %p143 = scmp.ne.s32.totalorder %s134, %s135
    %p144 = scmp.eq.s32.totalorder %s21, 0
    %p145 = por %p143, %p144
    %p146 = scmp.ne.s32.totalorder %s134, %s135
    %p147 = scmp.eq.s32.totalorder %s22, 1
    %p148 = por %p146, %p147
    %p150 = scmp.ne.s32.totalorder %s135, %s149
    %p151 = scmp.eq.s32.totalorder %s22, 0
    %p152 = por %p150, %p151
    %s154 = sadd.s32 %s153, 1
    %p157 = scmp.eq.s32.totalorder %s16, 1
    %p158 = scmp.ne.s32.totalorder %s153, %s155
    %p159 = scmp.eq.s32.totalorder %s16, 0
    %p160 = por %p158, %p159
    %p161 = scmp.ne.s32.totalorder %s153, %s155
    %p162 = scmp.eq.s32.totalorder %s21, 1
    %p163 = por %p161, %p162
    %p164 = scmp.ne.s32.totalorder %s155, %s156
    %p165 = scmp.eq.s32.totalorder %s21, 0
    %p166 = por %p164, %p165
    %p167 = scmp.ne.s32.totalorder %s155, %s156
    %p168 = scmp.eq.s32.totalorder %s22, 1
    %p169 = por %p167, %p168
    %p171 = scmp.ne.s32.totalorder %s156, %s170
    %p172 = scmp.eq.s32.totalorder %s22, 0
    %p173 = por %p171, %p172
    %s175 = sadd.s32 %s174, 1
    %p178 = scmp.eq.s32.totalorder %s16, 1
    %p179 = scmp.ne.s32.totalorder %s174, %s176
    %p180 = scmp.eq.s32.totalorder %s16, 0
    %p181 = por %p179, %p180
    %p182 = scmp.ne.s32.totalorder %s174, %s176
    %p183 = scmp.eq.s32.totalorder %s21, 1
    %p184 = por %p182, %p183
    %p185 = scmp.ne.s32.totalorder %s176, %s177
    %p186 = scmp.eq.s32.totalorder %s21, 0
    %p187 = por %p185, %p186
    %p188 = scmp.ne.s32.totalorder %s176, %s177
    %p189 = scmp.eq.s32.totalorder %s22, 1
    %p190 = por %p188, %p189
    %p192 = scmp.ne.s32.totalorder %s177, %s191
    %p193 = scmp.eq.s32.totalorder %s22, 0
    %p194 = por %p192, %p193
    %s196 = sadd.s32 %s195, 1
    %p199 = scmp.eq.s32.totalorder %s16, 1
    %p200 = scmp.ne.s32.totalorder %s195, %s197
    %p201 = scmp.eq.s32.totalorder %s16, 0
    %p202 = por %p200, %p201
    %p203 = scmp.ne.s32.totalorder %s195, %s197
    %p204 = scmp.eq.s32.totalorder %s21, 1
    %p205 = por %p203, %p204
    %p206 = scmp.ne.s32.totalorder %s197, %s198
    %p207 = scmp.eq.s32.totalorder %s21, 0
    %p208 = por %p206, %p207
    %p209 = scmp.ne.s32.totalorder %s197, %s198
    %p210 = scmp.eq.s32.totalorder %s22, 1
    %p211 = por %p209, %p210
    %p213 = scmp.ne.s32.totalorder %s198, %s212
    %p214 = scmp.eq.s32.totalorder %s22, 0
    %p215 = por %p213, %p214
    %s217 = sadd.s32 %s216, 1
    %p220 = scmp.eq.s32.totalorder %s16, 1
    %p221 = scmp.ne.s32.totalorder %s216, %s218
    %p222 = scmp.eq.s32.totalorder %s16, 0
    %p223 = por %p221, %p222
    %p224 = scmp.ne.s32.totalorder %s216, %s218
    %p225 = scmp.eq.s32.totalorder %s21, 1
    %p226 = por %p224, %p225
    %p227 = scmp.ne.s32.totalorder %s218, %s219
    %p228 = scmp.eq.s32.totalorder %s21, 0
    %p229 = por %p227, %p228
    %p230 = scmp.ne.s32.totalorder %s218, %s219
    %p231 = scmp.eq.s32.totalorder %s22, 1
    %p232 = por %p230, %p231
    %p234 = scmp.ne.s32.totalorder %s219, %s233
    %p235 = scmp.eq.s32.totalorder %s22, 0
    %p236 = por %p234, %p235
    %s238 = sadd.s32 %s237, 1
    %p241 = scmp.eq.s32.totalorder %s16, 1
    %p242 = scmp.ne.s32.totalorder %s237, %s239
    %p243 = scmp.eq.s32.totalorder %s16, 0
    %p244 = por %p242, %p243
    %p245 = scmp.ne.s32.totalorder %s237, %s239
    %p246 = scmp.eq.s32.totalorder %s21, 1
    %p247 = por %p245, %p246
    %p248 = scmp.ne.s32.totalorder %s239, %s240
    %p249 = scmp.eq.s32.totalorder %s21, 0
    %p250 = por %p248, %p249
    %p251 = scmp.ne.s32.totalorder %s239, %s240
    %p252 = scmp.eq.s32.totalorder %s22, 1
    %p253 = por %p251, %p252
    %p255 = scmp.ne.s32.totalorder %s240, %s254
    %p256 = scmp.eq.s32.totalorder %s22, 0
    %p257 = por %p255, %p256
    %s258 = ssub.s32 %s23, %s35
    %s259 = ssub.s32 %s24, %s31
    %s260 = sor.u32 %s258, %s259
    %p261 = scmp.eq.s32.totalorder %s260, 0
    %s263 = sadd.s32 %s262, 1
    %s264 = scalar_select %p261, %s262, %s263
    %p267 = pneg %p261
    %p268 = scmp.eq.s32.totalorder %s16, 1
    %p269 = por %p267, %p268
    %p270 = scmp.ne.s32.totalorder %s262, %s265
    %p271 = scmp.eq.s32.totalorder %s16, 0
    %p272 = por %p270, %p271
    %p273 = scmp.ne.s32.totalorder %s262, %s265
    %p274 = scmp.eq.s32.totalorder %s21, 1
    %p275 = por %p273, %p274
    %p276 = scmp.ne.s32.totalorder %s265, %s266
    %p277 = scmp.eq.s32.totalorder %s21, 0
    %p278 = por %p276, %p277
    %p279 = scmp.ne.s32.totalorder %s265, %s266
    %p280 = scmp.eq.s32.totalorder %s22, 1
    %p281 = por %p279, %p280
    %p283 = scmp.ne.s32.totalorder %s266, %s282
    %p284 = scmp.eq.s32.totalorder %s22, 0
    %p285 = por %p283, %p284
    %p286 = scmp.le.s32.totalorder 1, %s16
    %p287 = scmp.lt.s32.totalorder %s16, 3
    %p288 = pnand %p286, %p287
    %p289 = pneg %p288
    // Predicated region
    $region9: #{esm_decoder_full_moe.7} parent=5 // pred_check
      _
    $region10: #{esm_decoder_full_moe.7} parent=5 // pred_check_branch
      %291 = sbr.rel (%p288) target = $region12
    $region11: #{esm_decoder_full_moe.7} parent=5 // pred_region
      %s292 = ssub.s32 %s16, 1
      // Predicated region
      $region13: #{esm_decoder_full_moe.7} parent=11 // pred_check
        %p293 = pneg %p103
      $region14: #{esm_decoder_full_moe.7} parent=11 // pred_check_branch
        %295 = sbr.rel (%p293) target = $region16
      $region15: #{esm_decoder_full_moe.7} parent=11 // pred_region
        _
      $region16: #{esm_decoder_full_moe.7} parent=11 // pred_fallthru
        _
      // Predicated region
      $region17: #{esm_decoder_full_moe.7} parent=11 // pred_check
        %p296 = pneg %p124
      $region18: #{esm_decoder_full_moe.7} parent=11 // pred_check_branch
        %298 = sbr.rel (%p296) target = $region20
      $region19: #{esm_decoder_full_moe.7} parent=11 // pred_region
        _
      $region20: #{esm_decoder_full_moe.7} parent=11 // pred_fallthru
        _
      // Predicated region
      $region21: #{esm_decoder_full_moe.7} parent=11 // pred_check
        %p299 = pneg %p145
      $region22: #{esm_decoder_full_moe.7} parent=11 // pred_check_branch
        %301 = sbr.rel (%p299) target = $region24
      $region23: #{esm_decoder_full_moe.7} parent=11 // pred_region
        _
      $region24: #{esm_decoder_full_moe.7} parent=11 // pred_fallthru
        _
      // Predicated region
      $region25: #{esm_decoder_full_moe.7} parent=11 // pred_check
        %p302 = pneg %p166
      $region26: #{esm_decoder_full_moe.7} parent=11 // pred_check_branch
        %304 = sbr.rel (%p302) target = $region28
      $region27: #{esm_decoder_full_moe.7} parent=11 // pred_region
        _
      $region28: #{esm_decoder_full_moe.7} parent=11 // pred_fallthru
        _
      // Predicated region
      $region29: #{esm_decoder_full_moe.7} parent=11 // pred_check
        %p305 = pneg %p187
      $region30: #{esm_decoder_full_moe.7} parent=11 // pred_check_branch
        %307 = sbr.rel (%p305) target = $region32
      $region31: #{esm_decoder_full_moe.7} parent=11 // pred_region
        _
      $region32: #{esm_decoder_full_moe.7} parent=11 // pred_fallthru
        _
      // Predicated region
      $region33: #{esm_decoder_full_moe.7} parent=11 // pred_check
        %p308 = pneg %p208
      $region34: #{esm_decoder_full_moe.7} parent=11 // pred_check_branch
        %310 = sbr.rel (%p308) target = $region36
      $region35: #{esm_decoder_full_moe.7} parent=11 // pred_region
        _
      $region36: #{esm_decoder_full_moe.7} parent=11 // pred_fallthru
        _
      // Predicated region
      $region37: #{esm_decoder_full_moe.7} parent=11 // pred_check
        %p311 = pneg %p229
      $region38: #{esm_decoder_full_moe.7} parent=11 // pred_check_branch
        %313 = sbr.rel (%p311) target = $region40
      $region39: #{esm_decoder_full_moe.7} parent=11 // pred_region
        _
      $region40: #{esm_decoder_full_moe.7} parent=11 // pred_fallthru
        _
      // Predicated region
      $region41: #{esm_decoder_full_moe.7} parent=11 // pred_check
        %p314 = pneg %p250
      $region42: #{esm_decoder_full_moe.7} parent=11 // pred_check_branch
        %316 = sbr.rel (%p314) target = $region44
      $region43: #{esm_decoder_full_moe.7} parent=11 // pred_region
        _
      $region44: #{esm_decoder_full_moe.7} parent=11 // pred_fallthru
        _
    $region12: #{esm_decoder_full_moe.7} parent=5 // pred_fallthru
      _
    %p317 = scmp.lt.s32.totalorder %s16, 2
    // Predicated region
    $region45: #{esm_decoder_full_moe.7} parent=5 // pred_check
      %p318 = pneg %p317
    $region46: #{esm_decoder_full_moe.7} parent=5 // pred_check_branch
      %320 = sbr.rel (%p318) target = $region48
    $region47: #{esm_decoder_full_moe.7} parent=5 // pred_region
      // Predicated region
      $region49: #{esm_decoder_full_moe.7} parent=47 // pred_check
        %p321 = pneg %p50
      $region50: #{esm_decoder_full_moe.7} parent=47 // pred_check_branch
        %323 = sbr.rel (%p321) target = $region52
      $region51: #{esm_decoder_full_moe.7} parent=47 // pred_region
        %p324 = scmp.lt.s32.totalorder %s23, 1
        %s325 = scalar_select %p324, %s23, 1
        %p326 = scmp.lt.s32.totalorder %s24, 0
        %s327 = scalar_select %p326, %s24, 0
        %s328 = sadd.s32 %s327, %s325
        %s329 = smul.addr %s328, 8
        %s330 = scalar_lea.vmem %s0, %s329
      $region52: #{esm_decoder_full_moe.7} parent=47 // pred_fallthru
        _
      // Predicated region
      $region53: #{esm_decoder_full_moe.7} parent=47 // pred_check
        %p331 = pneg %p76
      $region54: #{esm_decoder_full_moe.7} parent=47 // pred_check_branch
        %333 = sbr.rel (%p331) target = $region56
      $region55: #{esm_decoder_full_moe.7} parent=47 // pred_region
        %p334 = scmp.lt.s32.totalorder %s23, 1
        %s335 = scalar_select %p334, %s23, 1
        %s336 = smul.addr %s335, 8
        %s337 = scalar_lea.vmem %s1, %s336
      $region56: #{esm_decoder_full_moe.7} parent=47 // pred_fallthru
        _
    $region48: #{esm_decoder_full_moe.7} parent=5 // pred_fallthru
      _
    %p338 = scmp.le.s32.totalorder 1, %s16
    %p339 = scmp.lt.s32.totalorder %s16, 3
    %p340 = pnand %p338, %p339
    %p341 = pneg %p340
    // Predicated region
    $region57: #{esm_decoder_full_moe.7} parent=5 // pred_check
      _
    $region58: #{esm_decoder_full_moe.7} parent=5 // pred_check_branch
      %343 = sbr.rel (%p340) target = $region60
    $region59: #{esm_decoder_full_moe.7} parent=5 // pred_region
      %s344 = ssub.s32 %s16, 1
      %p345 = scmp.lt.s32.totalorder %s25, 1
      %s346 = scalar_select %p345, %s25, 1
      %p347 = scmp.lt.s32.totalorder %s26, 0
      %s348 = scalar_select %p347, %s26, 0
      %s349 = sadd.s32 %s348, %s346
      %s350 = smul.addr %s349, 8
      %s351 = scalar_lea.vmem %s0, %s350
      %p352 = pneg %p56
      %p353 = pneg %p53
      %p354 = scmp.lt.s32.totalorder %s25, 1
      %s355 = scalar_select %p354, %s25, 1
      %s356 = smul.addr %s355, 8
      %s357 = scalar_lea.vmem %s1, %s356
      %p358 = pneg %p82
      %p359 = pneg %p79
      %p360 = pneg %p103
      %p361 = pneg %p100
      %p362 = pneg %p124
      %p363 = pneg %p121
      %p364 = pneg %p145
      %p365 = pneg %p142
      %p366 = pneg %p166
      %p367 = pneg %p163
      %p368 = pneg %p187
      %p369 = pneg %p184
      %p370 = pneg %p208
      %p371 = pneg %p205
      %p372 = pneg %p229
      %p373 = pneg %p226
      %p374 = pneg %p250
      %p375 = pneg %p247
      %p376 = pneg %p278
      %p377 = pneg %p275
      %p378 = scmp.lt.s32.totalorder %s25, 1
      %s379 = scalar_select %p378, %s25, 1
      %p380 = scmp.lt.s32.totalorder %s26, 0
      %s381 = scalar_select %p380, %s26, 0
      %s382 = sadd.s32 %s381, %s379
      %s383 = smul.addr %s382, 8
      %s384 = scalar_lea.vmem %s10, %s383
      %p385 = scmp.lt.s32.totalorder %s25, 1
      %s386 = scalar_select %p385, %s25, 1
      %p387 = scmp.lt.s32.totalorder %s26, 0
      %s388 = scalar_select %p387, %s26, 0
      %s389 = sadd.s32 %s388, %s386
      %s390 = smul.addr %s389, 8
      %s391 = scalar_lea.vmem %s0, %s390
      %p392 = scmp.lt.s32.totalorder %s25, 1
      %s393 = scalar_select %p392, %s25, 1
      %s394 = smul.addr %s393, 8
      %s395 = scalar_lea.vmem %s1, %s394
      %p396 = scmp.lt.s32.totalorder %s25, 1
      %s397 = scalar_select %p396, %s25, 1
      %p398 = scmp.lt.s32.totalorder %s26, 0
      %s399 = scalar_select %p398, %s26, 0
      %s400 = sadd.s32 %s399, %s397
      %s401 = smul.addr %s400, 8
      %s402 = scalar_lea.vmem %s10, %s401
      %v404 = vld [vmem:[%s391] sm:$0xff]
      %v405 = vld [vmem:[%s395] sm:$0xff]
      %v406 = vpack.c.bf16 %v404, %v404
      %v407 = vld [vmem:[%s2] sm:$0xf]
      %v408 = vld [vmem:[%s2 + $0x4] sm:$0xf]
      %v409 = vld [vmem:[%s2 + $0x8] sm:$0xf]
      %v410 = vld [vmem:[%s2 + $0xc] sm:$0xf]
      %v411 = vld [vmem:[%s3] sm:$0x1]
      %v413 = vlaneseq
      %v414 = vshrl.u32 %v413, 7
      %v415 = vsub.s32 0, %v414
      %v416 = vrot.slane %v411, %v415
      %v422 = vunpack.c.l.b16 %v407
      %v423 = vunpack.c.l.b16 %v408
      %v424 = vunpack.c.l.b16 %v409
      %v425 = vunpack.c.l.b16 %v410
      %v426 = vpack.c.b16 %v423, %v422
      %v427 = vpack.c.b16 %v425, %v424
      %vm430 = vcmask 261120
      %v432 = vsel %vm430, %v406, 0
      %434 = vmatprep.subr.bf16.mxu0 0
      %435 = vmatpush1.bf16.msra.mxu0 0
      %436 = vmatprep.subr.bf16.mxu0 0
      %437 = vmatpush1.bf16.msra.mxu0 0
      %438 = vmatprep.subr.bf16.mxu0 0
      %439 = vmatpush1.bf16.msra.mxu0 0
      %440 = vmatprep.subr.bf16.mxu0 0
      %441 = vmatpush1.bf16.msra.mxu0 0
      %442 = vmatprep.subr.bf16.mxu0 0
      %443 = vmatpush1.bf16.msra.mxu0 0
      %444 = vmatprep.subr.bf16.mxu0 0
      %445 = vmatpush1.bf16.msra.mxu0 0
      %446 = vmatprep.subr.bf16.mxu0 0
      %447 = vmatpush1.bf16.msra.mxu0 %v427
      %448 = vmatprep.subr.bf16.mxu0 0
      %449 = vmatpush1.bf16.msra.mxu0 %v426
      %450 = vmatprep.subr.bf16.mxu0 0
      %451 = vmatpush2.bf16.msra.mxu0 0
      %452 = vmatprep.subr.bf16.mxu0 0
      %453 = vmatpush2.bf16.msra.mxu0 0
      %454 = vmatprep.subr.bf16.mxu0 0
      %455 = vmatpush2.bf16.msra.mxu0 0
      %456 = vmatprep.subr.bf16.mxu0 0
      %457 = vmatpush2.bf16.msra.mxu0 0
      %458 = vmatprep.subr.bf16.mxu0 0
      %459 = vmatpush2.bf16.msra.mxu0 0
      %460 = vmatprep.subr.bf16.mxu0 0
      %461 = vmatpush2.bf16.msra.mxu0 0
      %462 = vmatprep.subr.bf16.mxu0 0
      %463 = vmatpush2.bf16.msra.mxu0 0
      %464 = vmatprep.subr.bf16.mxu0 0
      %465 = vmatpush2.bf16.msra.mxu0 0
      %466 = vmatprep.mubr.bf16.mxu0 0
      %467 = vmatmul.mubr.bf16.gmra.mxu0 %v432
      %v468 = vpop.f32.mrf.mxu0
      %v469 = vadd.f32 %v416, %v468
      %v470 = vpop.f32.mrf.mxu0
      %v471 = vpop.f32.mrf.mxu0
      %v472 = vpop.f32.mrf.mxu0
      %473 = vdwg.mxu0
      %v474 = vmul.f32 %v469, 0.35355338
      %v475 = vpack.c.bf16 %v405, %v405
      %v476 = vld [vmem:[%s4] sm:$0xf]
      %v477 = vld [vmem:[%s4 + $0x4] sm:$0xf]
      %v478 = vld [vmem:[%s4 + $0x8] sm:$0xf]
      %v479 = vld [vmem:[%s4 + $0xc] sm:$0xf]
      %v480 = vld [vmem:[%s5] sm:$0x1]
      %v482 = vlaneseq
      %v483 = vshrl.u32 %v482, 7
      %v484 = vsub.s32 0, %v483
      %v485 = vrot.slane %v480, %v484
      %v491 = vunpack.c.l.b16 %v476
      %v492 = vunpack.c.l.b16 %v477
      %v493 = vunpack.c.l.b16 %v478
      %v494 = vunpack.c.l.b16 %v479
      %v495 = vpack.c.b16 %v492, %v491
      %v496 = vpack.c.b16 %v494, %v493
      %v500 = vsel %vm430, %v475, 0
      %502 = vmatprep.subr.bf16.mxu0 0
      %503 = vmatpush1.bf16.msra.mxu0 0
      %504 = vmatprep.subr.bf16.mxu0 0
      %505 = vmatpush1.bf16.msra.mxu0 0
      %506 = vmatprep.subr.bf16.mxu0 0
      %507 = vmatpush1.bf16.msra.mxu0 0
      %508 = vmatprep.subr.bf16.mxu0 0
      %509 = vmatpush1.bf16.msra.mxu0 0
      %510 = vmatprep.subr.bf16.mxu0 0
      %511 = vmatpush1.bf16.msra.mxu0 0
      %512 = vmatprep.subr.bf16.mxu0 0
      %513 = vmatpush1.bf16.msra.mxu0 0
      %514 = vmatprep.subr.bf16.mxu0 0
      %515 = vmatpush1.bf16.msra.mxu0 %v496
      %516 = vmatprep.subr.bf16.mxu0 0
      %517 = vmatpush1.bf16.msra.mxu0 %v495
      %518 = vmatprep.subr.bf16.mxu0 0
      %519 = vmatpush2.bf16.msra.mxu0 0
      %520 = vmatprep.subr.bf16.mxu0 0
      %521 = vmatpush2.bf16.msra.mxu0 0
      %522 = vmatprep.subr.bf16.mxu0 0
      %523 = vmatpush2.bf16.msra.mxu0 0
      %524 = vmatprep.subr.bf16.mxu0 0
      %525 = vmatpush2.bf16.msra.mxu0 0
      %526 = vmatprep.subr.bf16.mxu0 0
      %527 = vmatpush2.bf16.msra.mxu0 0
      %528 = vmatprep.subr.bf16.mxu0 0
      %529 = vmatpush2.bf16.msra.mxu0 0
      %530 = vmatprep.subr.bf16.mxu0 0
      %531 = vmatpush2.bf16.msra.mxu0 0
      %532 = vmatprep.subr.bf16.mxu0 0
      %533 = vmatpush2.bf16.msra.mxu0 0
      %534 = vmatprep.mubr.bf16.mxu0 0
      %535 = vmatmul.mubr.bf16.gmra.mxu0 %v500
      %v536 = vpop.f32.mrf.mxu0
      %v537 = vadd.f32 %v485, %v536
      %v538 = vpop.f32.mrf.mxu0
      %v539 = vpop.f32.mrf.mxu0
      %v540 = vpop.f32.mrf.mxu0
      %541 = vdwg.mxu0
      %v542 = vpack.c.bf16 %v474, %v474
      %v543 = vpack.c.bf16 %v537, %v537
      %v544 = vld [vmem:[%s6] sm:$0xf]
      %v545 = vld [vmem:[%s6 + $0x4] sm:$0xf]
      %v546 = vld [vmem:[%s6 + $0x8] sm:$0xf]
      %v547 = vld [vmem:[%s6 + $0xc] sm:$0xf]
      %vm548 = vcmask 64512
      %v550 = vsel %vm548, %v542, 0
      %v553 = vsel %vm548, %v543, 0
      %555 = vmatprep.subr.bf16.mxu0 0
      %556 = vmatpush1.bf16.xpose.msra.mxu0 0
      %557 = vmatprep.subr.bf16.mxu0 0
      %558 = vmatpush1.bf16.xpose.msra.mxu0 0
      %559 = vmatprep.subr.bf16.mxu0 0
      %560 = vmatpush1.bf16.xpose.msra.mxu0 0
      %561 = vmatprep.subr.bf16.mxu0 0
      %562 = vmatpush1.bf16.xpose.msra.mxu0 0
      %563 = vmatprep.subr.bf16.mxu0 0
      %564 = vmatpush1.bf16.xpose.msra.mxu0 0
      %565 = vmatprep.subr.bf16.mxu0 0
      %566 = vmatpush1.bf16.xpose.msra.mxu0 0
      %567 = vmatprep.subr.bf16.mxu0 0
      %568 = vmatpush1.bf16.xpose.msra.mxu0 0
      %569 = vmatprep.subr.bf16.mxu0 0
      %570 = vmatpush1.bf16.xpose.msra.mxu0 %v553
      %571 = vmatprep.subr.bf16.mxu0 0
      %572 = vmatpush2.bf16.xpose.msra.mxu0 0
      %573 = vmatprep.subr.bf16.mxu0 0
      %574 = vmatpush2.bf16.xpose.msra.mxu0 0
      %575 = vmatprep.subr.bf16.mxu0 0
      %576 = vmatpush2.bf16.xpose.msra.mxu0 0
      %577 = vmatprep.subr.bf16.mxu0 0
      %578 = vmatpush2.bf16.xpose.msra.mxu0 0
      %579 = vmatprep.subr.bf16.mxu0 0
      %580 = vmatpush2.bf16.xpose.msra.mxu0 0
      %581 = vmatprep.subr.bf16.mxu0 0
      %582 = vmatpush2.bf16.xpose.msra.mxu0 0
      %583 = vmatprep.subr.bf16.mxu0 0
      %584 = vmatpush2.bf16.xpose.msra.mxu0 0
      %585 = vmatprep.subr.bf16.mxu0 0
      %586 = vmatpush2.bf16.xpose.msra.mxu0 0
      %587 = vmatprep.mubr.bf16.mxu0 0
      %588 = vmatmul.mubr.bf16.gmra.mxu0 %v550
      %v589 = vpop.f32.mrf.mxu0
      %v590 = vadd.f32 0.0, %v589
      %v591 = vpop.f32.mrf.mxu0
      %v592 = vpop.f32.mrf.mxu0
      %v593 = vpop.f32.mrf.mxu0
      %594 = vdwg.mxu0
      %v595 = vsel %vm548, %v590, -inf
      %596 = vmax.xlane.f32.xlu0 %v595
      %v597 = vpop.xlane.xlu0 %596
      %v598 = vsub.f32 %v590, %v597
      %v599 = vmul.f32 %v598, 1.442695
      %v600 = vpow.pop %v599
      %v601 = vsel %vm548, %v600, 0.0
      %602 = vadd.xlane.f32.xlu0 %v601
      %v603 = vpop.xlane.xlu0 %602
      %v604 = vrcp.pop %v603
      %v605 = vmul.f32 %v600, %v604
      %v606 = vpack.c.bf16 %v605, %v605
      %608 = vrot.lane.b32.xlu0 %v543, 96
      %v609 = vpop.permute.xlu0 %608
      %v611 = vsel %vm548, %v606, 0
      %vm613 = vcmask 1043456
      %v615 = vsel %vm613, %v609, 0
      %617 = vmatprep.subr.bf16.mxu0 0
      %618 = vmatpush1.bf16.msra.mxu0 0
      %619 = vmatprep.subr.bf16.mxu0 0
      %620 = vmatpush1.bf16.msra.mxu0 0
      %621 = vmatprep.subr.bf16.mxu0 0
      %622 = vmatpush1.bf16.msra.mxu0 0
      %623 = vmatprep.subr.bf16.mxu0 0
      %624 = vmatpush1.bf16.msra.mxu0 0
      %625 = vmatprep.subr.bf16.mxu0 0
      %626 = vmatpush1.bf16.msra.mxu0 0
      %627 = vmatprep.subr.bf16.mxu0 0
      %628 = vmatpush1.bf16.msra.mxu0 0
      %629 = vmatprep.subr.bf16.mxu0 0
      %630 = vmatpush1.bf16.msra.mxu0 0
      %631 = vmatprep.subr.bf16.mxu0 0
      %632 = vmatpush1.bf16.msra.mxu0 %v615
      %633 = vmatprep.subr.bf16.mxu0 0
      %634 = vmatpush2.bf16.msra.mxu0 0
      %635 = vmatprep.subr.bf16.mxu0 0
      %636 = vmatpush2.bf16.msra.mxu0 0
      %637 = vmatprep.subr.bf16.mxu0 0
      %638 = vmatpush2.bf16.msra.mxu0 0
      %639 = vmatprep.subr.bf16.mxu0 0
      %640 = vmatpush2.bf16.msra.mxu0 0
      %641 = vmatprep.subr.bf16.mxu0 0
      %642 = vmatpush2.bf16.msra.mxu0 0
      %643 = vmatprep.subr.bf16.mxu0 0
      %644 = vmatpush2.bf16.msra.mxu0 0
      %645 = vmatprep.subr.bf16.mxu0 0
      %646 = vmatpush2.bf16.msra.mxu0 0
      %647 = vmatprep.subr.bf16.mxu0 0
      %648 = vmatpush2.bf16.msra.mxu0 0
      %649 = vmatprep.mubr.bf16.mxu0 0
      %650 = vmatmul.mubr.bf16.gmra.mxu0 %v611
      %v651 = vpop.f32.mrf.mxu0
      %v652 = vadd.f32 0.0, %v651
      %v653 = vpop.f32.mrf.mxu0
      %v654 = vpop.f32.mrf.mxu0
      %v655 = vpop.f32.mrf.mxu0
      %656 = vdwg.mxu0
      %v657 = vpack.c.bf16 %v652, %v652
      %659 = vrot.lane.b32.xlu0 %v542, 120
      %v660 = vpop.permute.xlu0 %659
      %661 = vrot.lane.b32.xlu0 %v543, 120
      %v662 = vpop.permute.xlu0 %661
      %v664 = vsel %vm548, %v660, 0
      %v667 = vsel %vm548, %v662, 0
      %669 = vmatprep.subr.bf16.mxu0 0
      %670 = vmatpush1.bf16.xpose.msra.mxu0 0
      %671 = vmatprep.subr.bf16.mxu0 0
      %672 = vmatpush1.bf16.xpose.msra.mxu0 0
      %673 = vmatprep.subr.bf16.mxu0 0
      %674 = vmatpush1.bf16.xpose.msra.mxu0 0
      %675 = vmatprep.subr.bf16.mxu0 0
      %676 = vmatpush1.bf16.xpose.msra.mxu0 0
      %677 = vmatprep.subr.bf16.mxu0 0
      %678 = vmatpush1.bf16.xpose.msra.mxu0 0
      %679 = vmatprep.subr.bf16.mxu0 0
      %680 = vmatpush1.bf16.xpose.msra.mxu0 0
      %681 = vmatprep.subr.bf16.mxu0 0
      %682 = vmatpush1.bf16.xpose.msra.mxu0 0
      %683 = vmatprep.subr.bf16.mxu0 0
      %684 = vmatpush1.bf16.xpose.msra.mxu0 %v667
      %685 = vmatprep.subr.bf16.mxu0 0
      %686 = vmatpush2.bf16.xpose.msra.mxu0 0
      %687 = vmatprep.subr.bf16.mxu0 0
      %688 = vmatpush2.bf16.xpose.msra.mxu0 0
      %689 = vmatprep.subr.bf16.mxu0 0
      %690 = vmatpush2.bf16.xpose.msra.mxu0 0
      %691 = vmatprep.subr.bf16.mxu0 0
      %692 = vmatpush2.bf16.xpose.msra.mxu0 0
      %693 = vmatprep.subr.bf16.mxu0 0
      %694 = vmatpush2.bf16.xpose.msra.mxu0 0
      %695 = vmatprep.subr.bf16.mxu0 0
      %696 = vmatpush2.bf16.xpose.msra.mxu0 0
      %697 = vmatprep.subr.bf16.mxu0 0
      %698 = vmatpush2.bf16.xpose.msra.mxu0 0
      %699 = vmatprep.subr.bf16.mxu0 0
      %700 = vmatpush2.bf16.xpose.msra.mxu0 0
      %701 = vmatprep.mubr.bf16.mxu0 0
      %702 = vmatmul.mubr.bf16.gmra.mxu0 %v664
      %v703 = vpop.f32.mrf.mxu0
      %v704 = vadd.f32 0.0, %v703
      %v705 = vpop.f32.mrf.mxu0
      %v706 = vpop.f32.mrf.mxu0
      %v707 = vpop.f32.mrf.mxu0
      %708 = vdwg.mxu0
      %v709 = vsel %vm548, %v704, -inf
      %710 = vmax.xlane.f32.xlu0 %v709
      %v711 = vpop.xlane.xlu0 %710
      %v712 = vsub.f32 %v704, %v711
      %v713 = vmul.f32 %v712, 1.442695
      %v714 = vpow.pop %v713
      %v715 = vsel %vm548, %v714, 0.0
      %716 = vadd.xlane.f32.xlu0 %v715
      %v717 = vpop.xlane.xlu0 %716
      %v718 = vrcp.pop %v717
      %v719 = vmul.f32 %v714, %v718
      %v720 = vpack.c.bf16 %v719, %v719
      %721 = vrot.lane.b32.xlu0 %v543, 88
      %v722 = vpop.permute.xlu0 %721
      %v724 = vsel %vm548, %v720, 0
      %v727 = vsel %vm613, %v722, 0
      %729 = vmatprep.subr.bf16.mxu0 0
      %730 = vmatpush1.bf16.msra.mxu0 0
      %731 = vmatprep.subr.bf16.mxu0 0
      %732 = vmatpush1.bf16.msra.mxu0 0
      %733 = vmatprep.subr.bf16.mxu0 0
      %734 = vmatpush1.bf16.msra.mxu0 0
      %735 = vmatprep.subr.bf16.mxu0 0
      %736 = vmatpush1.bf16.msra.mxu0 0
      %737 = vmatprep.subr.bf16.mxu0 0
      %738 = vmatpush1.bf16.msra.mxu0 0
      %739 = vmatprep.subr.bf16.mxu0 0
      %740 = vmatpush1.bf16.msra.mxu0 0
      %741 = vmatprep.subr.bf16.mxu0 0
      %742 = vmatpush1.bf16.msra.mxu0 0
      %743 = vmatprep.subr.bf16.mxu0 0
      %744 = vmatpush1.bf16.msra.mxu0 %v727
      %745 = vmatprep.subr.bf16.mxu0 0
      %746 = vmatpush2.bf16.msra.mxu0 0
      %747 = vmatprep.subr.bf16.mxu0 0
      %748 = vmatpush2.bf16.msra.mxu0 0
      %749 = vmatprep.subr.bf16.mxu0 0
      %750 = vmatpush2.bf16.msra.mxu0 0
      %751 = vmatprep.subr.bf16.mxu0 0
      %752 = vmatpush2.bf16.msra.mxu0 0
      %753 = vmatprep.subr.bf16.mxu0 0
      %754 = vmatpush2.bf16.msra.mxu0 0
      %755 = vmatprep.subr.bf16.mxu0 0
      %756 = vmatpush2.bf16.msra.mxu0 0
      %757 = vmatprep.subr.bf16.mxu0 0
      %758 = vmatpush2.bf16.msra.mxu0 0
      %759 = vmatprep.subr.bf16.mxu0 0
      %760 = vmatpush2.bf16.msra.mxu0 0
      %761 = vmatprep.mubr.bf16.mxu0 0
      %762 = vmatmul.mubr.bf16.gmra.mxu0 %v724
      %v763 = vpop.f32.mrf.mxu0
      %v764 = vadd.f32 0.0, %v763
      %v765 = vpop.f32.mrf.mxu0
      %v766 = vpop.f32.mrf.mxu0
      %v767 = vpop.f32.mrf.mxu0
      %768 = vdwg.mxu0
      %v769 = vpack.c.bf16 %v764, %v764
      %v771 = vsel %vm548, %v769, 0
      %v774 = vsel %vm613, %v545, 0
      %776 = vmatprep.subr.bf16.mxu0 0
      %777 = vmatpush1.bf16.msra.mxu0 0
      %778 = vmatprep.subr.bf16.mxu0 0
      %779 = vmatpush1.bf16.msra.mxu0 0
      %780 = vmatprep.subr.bf16.mxu0 0
      %781 = vmatpush1.bf16.msra.mxu0 0
      %782 = vmatprep.subr.bf16.mxu0 0
      %783 = vmatpush1.bf16.msra.mxu0 0
      %784 = vmatprep.subr.bf16.mxu0 0
      %785 = vmatpush1.bf16.msra.mxu0 0
      %786 = vmatprep.subr.bf16.mxu0 0
      %787 = vmatpush1.bf16.msra.mxu0 0
      %788 = vmatprep.subr.bf16.mxu0 0
      %789 = vmatpush1.bf16.msra.mxu0 0
      %790 = vmatprep.subr.bf16.mxu0 0
      %791 = vmatpush1.bf16.msra.mxu0 %v774
      %792 = vmatprep.subr.bf16.mxu0 0
      %793 = vmatpush2.bf16.msra.mxu0 0
      %794 = vmatprep.subr.bf16.mxu0 0
      %795 = vmatpush2.bf16.msra.mxu0 0
      %796 = vmatprep.subr.bf16.mxu0 0
      %797 = vmatpush2.bf16.msra.mxu0 0
      %798 = vmatprep.subr.bf16.mxu0 0
      %799 = vmatpush2.bf16.msra.mxu0 0
      %800 = vmatprep.subr.bf16.mxu0 0
      %801 = vmatpush2.bf16.msra.mxu0 0
      %802 = vmatprep.subr.bf16.mxu0 0
      %803 = vmatpush2.bf16.msra.mxu0 0
      %804 = vmatprep.subr.bf16.mxu0 0
      %805 = vmatpush2.bf16.msra.mxu0 0
      %806 = vmatprep.subr.bf16.mxu0 0
      %807 = vmatpush2.bf16.msra.mxu0 0
      %808 = vmatprep.mubr.bf16.mxu0 0
      %809 = vmatmul.mubr.bf16.gmra.mxu0 %v771
      %v810 = vpop.f32.mrf.mxu0
      %v811 = vadd.f32 0.0, %v810
      %v812 = vpop.f32.mrf.mxu0
      %v813 = vpop.f32.mrf.mxu0
      %v814 = vpop.f32.mrf.mxu0
      %815 = vdwg.mxu0
      %v817 = vsel %vm548, %v657, 0
      %v820 = vsel %vm613, %v544, 0
      %822 = vmatprep.subr.bf16.mxu0 0
      %823 = vmatpush1.bf16.msra.mxu0 0
      %824 = vmatprep.subr.bf16.mxu0 0
      %825 = vmatpush1.bf16.msra.mxu0 0
      %826 = vmatprep.subr.bf16.mxu0 0
      %827 = vmatpush1.bf16.msra.mxu0 0
      %828 = vmatprep.subr.bf16.mxu0 0
      %829 = vmatpush1.bf16.msra.mxu0 0
      %830 = vmatprep.subr.bf16.mxu0 0
      %831 = vmatpush1.bf16.msra.mxu0 0
      %832 = vmatprep.subr.bf16.mxu0 0
      %833 = vmatpush1.bf16.msra.mxu0 0
      %834 = vmatprep.subr.bf16.mxu0 0
      %835 = vmatpush1.bf16.msra.mxu0 0
      %836 = vmatprep.subr.bf16.mxu0 0
      %837 = vmatpush1.bf16.msra.mxu0 %v820
      %838 = vmatprep.subr.bf16.mxu0 0
      %839 = vmatpush2.bf16.msra.mxu0 0
      %840 = vmatprep.subr.bf16.mxu0 0
      %841 = vmatpush2.bf16.msra.mxu0 0
      %842 = vmatprep.subr.bf16.mxu0 0
      %843 = vmatpush2.bf16.msra.mxu0 0
      %844 = vmatprep.subr.bf16.mxu0 0
      %845 = vmatpush2.bf16.msra.mxu0 0
      %846 = vmatprep.subr.bf16.mxu0 0
      %847 = vmatpush2.bf16.msra.mxu0 0
      %848 = vmatprep.subr.bf16.mxu0 0
      %849 = vmatpush2.bf16.msra.mxu0 0
      %850 = vmatprep.subr.bf16.mxu0 0
      %851 = vmatpush2.bf16.msra.mxu0 0
      %852 = vmatprep.subr.bf16.mxu0 0
      %853 = vmatpush2.bf16.msra.mxu0 0
      %854 = vmatprep.mubr.bf16.mxu0 0
      %855 = vmatmul.mubr.bf16.gmra.mxu0 %v817
      %v856 = vpop.f32.mrf.mxu0
      %v857 = vadd.f32 %v811, %v856
      %v858 = vpop.f32.mrf.mxu0
      %v859 = vpop.f32.mrf.mxu0
      %v860 = vpop.f32.mrf.mxu0
      %861 = vdwg.mxu0
      %862 = vrot.lane.b32.xlu0 %v542, 112
      %v863 = vpop.permute.xlu0 %862
      %864 = vrot.lane.b32.xlu0 %v543, 112
      %v865 = vpop.permute.xlu0 %864
      %v867 = vsel %vm548, %v863, 0
      %v870 = vsel %vm548, %v865, 0
      %872 = vmatprep.subr.bf16.mxu0 0
      %873 = vmatpush1.bf16.xpose.msra.mxu0 0
      %874 = vmatprep.subr.bf16.mxu0 0
      %875 = vmatpush1.bf16.xpose.msra.mxu0 0
      %876 = vmatprep.subr.bf16.mxu0 0
      %877 = vmatpush1.bf16.xpose.msra.mxu0 0
      %878 = vmatprep.subr.bf16.mxu0 0
      %879 = vmatpush1.bf16.xpose.msra.mxu0 0
      %880 = vmatprep.subr.bf16.mxu0 0
      %881 = vmatpush1.bf16.xpose.msra.mxu0 0
      %882 = vmatprep.subr.bf16.mxu0 0
      %883 = vmatpush1.bf16.xpose.msra.mxu0 0
      %884 = vmatprep.subr.bf16.mxu0 0
      %885 = vmatpush1.bf16.xpose.msra.mxu0 0
      %886 = vmatprep.subr.bf16.mxu0 0
      %887 = vmatpush1.bf16.xpose.msra.mxu0 %v870
      %888 = vmatprep.subr.bf16.mxu0 0
      %889 = vmatpush2.bf16.xpose.msra.mxu0 0
      %890 = vmatprep.subr.bf16.mxu0 0
      %891 = vmatpush2.bf16.xpose.msra.mxu0 0
      %892 = vmatprep.subr.bf16.mxu0 0
      %893 = vmatpush2.bf16.xpose.msra.mxu0 0
      %894 = vmatprep.subr.bf16.mxu0 0
      %895 = vmatpush2.bf16.xpose.msra.mxu0 0
      %896 = vmatprep.subr.bf16.mxu0 0
      %897 = vmatpush2.bf16.xpose.msra.mxu0 0
      %898 = vmatprep.subr.bf16.mxu0 0
      %899 = vmatpush2.bf16.xpose.msra.mxu0 0
      %900 = vmatprep.subr.bf16.mxu0 0
      %901 = vmatpush2.bf16.xpose.msra.mxu0 0
      %902 = vmatprep.subr.bf16.mxu0 0
      %903 = vmatpush2.bf16.xpose.msra.mxu0 0
      %904 = vmatprep.mubr.bf16.mxu0 0
      %905 = vmatmul.mubr.bf16.gmra.mxu0 %v867
      %v906 = vpop.f32.mrf.mxu0
      %v907 = vadd.f32 0.0, %v906
      %v908 = vpop.f32.mrf.mxu0
      %v909 = vpop.f32.mrf.mxu0
      %v910 = vpop.f32.mrf.mxu0
      %911 = vdwg.mxu0
      %v912 = vsel %vm548, %v907, -inf
      %913 = vmax.xlane.f32.xlu0 %v912
      %v914 = vpop.xlane.xlu0 %913
      %v915 = vsub.f32 %v907, %v914
      %v916 = vmul.f32 %v915, 1.442695
      %v917 = vpow.pop %v916
      %v918 = vsel %vm548, %v917, 0.0
      %919 = vadd.xlane.f32.xlu0 %v918
      %v920 = vpop.xlane.xlu0 %919
      %v921 = vrcp.pop %v920
      %v922 = vmul.f32 %v917, %v921
      %v923 = vpack.c.bf16 %v922, %v922
      %924 = vrot.lane.b32.xlu0 %v543, 80
      %v925 = vpop.permute.xlu0 %924
      %v927 = vsel %vm548, %v923, 0
      %v930 = vsel %vm613, %v925, 0
      %932 = vmatprep.subr.bf16.mxu0 0
      %933 = vmatpush1.bf16.msra.mxu0 0
      %934 = vmatprep.subr.bf16.mxu0 0
      %935 = vmatpush1.bf16.msra.mxu0 0
      %936 = vmatprep.subr.bf16.mxu0 0
      %937 = vmatpush1.bf16.msra.mxu0 0
      %938 = vmatprep.subr.bf16.mxu0 0
      %939 = vmatpush1.bf16.msra.mxu0 0
      %940 = vmatprep.subr.bf16.mxu0 0
      %941 = vmatpush1.bf16.msra.mxu0 0
      %942 = vmatprep.subr.bf16.mxu0 0
      %943 = vmatpush1.bf16.msra.mxu0 0
      %944 = vmatprep.subr.bf16.mxu0 0
      %945 = vmatpush1.bf16.msra.mxu0 0
      %946 = vmatprep.subr.bf16.mxu0 0
      %947 = vmatpush1.bf16.msra.mxu0 %v930
      %948 = vmatprep.subr.bf16.mxu0 0
      %949 = vmatpush2.bf16.msra.mxu0 0
      %950 = vmatprep.subr.bf16.mxu0 0
      %951 = vmatpush2.bf16.msra.mxu0 0
      %952 = vmatprep.subr.bf16.mxu0 0
      %953 = vmatpush2.bf16.msra.mxu0 0
      %954 = vmatprep.subr.bf16.mxu0 0
      %955 = vmatpush2.bf16.msra.mxu0 0
      %956 = vmatprep.subr.bf16.mxu0 0
      %957 = vmatpush2.bf16.msra.mxu0 0
      %958 = vmatprep.subr.bf16.mxu0 0
      %959 = vmatpush2.bf16.msra.mxu0 0
      %960 = vmatprep.subr.bf16.mxu0 0
      %961 = vmatpush2.bf16.msra.mxu0 0
      %962 = vmatprep.subr.bf16.mxu0 0
      %963 = vmatpush2.bf16.msra.mxu0 0
      %964 = vmatprep.mubr.bf16.mxu0 0
      %965 = vmatmul.mubr.bf16.gmra.mxu0 %v927
      %v966 = vpop.f32.mrf.mxu0
      %v967 = vadd.f32 0.0, %v966
      %v968 = vpop.f32.mrf.mxu0
      %v969 = vpop.f32.mrf.mxu0
      %v970 = vpop.f32.mrf.mxu0
      %971 = vdwg.mxu0
      %v972 = vpack.c.bf16 %v967, %v967
      %v974 = vsel %vm548, %v972, 0
      %v977 = vsel %vm613, %v546, 0
      %979 = vmatprep.subr.bf16.mxu0 0
      %980 = vmatpush1.bf16.msra.mxu0 0
      %981 = vmatprep.subr.bf16.mxu0 0
      %982 = vmatpush1.bf16.msra.mxu0 0
      %983 = vmatprep.subr.bf16.mxu0 0
      %984 = vmatpush1.bf16.msra.mxu0 0
      %985 = vmatprep.subr.bf16.mxu0 0
      %986 = vmatpush1.bf16.msra.mxu0 0
      %987 = vmatprep.subr.bf16.mxu0 0
      %988 = vmatpush1.bf16.msra.mxu0 0
      %989 = vmatprep.subr.bf16.mxu0 0
      %990 = vmatpush1.bf16.msra.mxu0 0
      %991 = vmatprep.subr.bf16.mxu0 0
      %992 = vmatpush1.bf16.msra.mxu0 0
      %993 = vmatprep.subr.bf16.mxu0 0
      %994 = vmatpush1.bf16.msra.mxu0 %v977
      %995 = vmatprep.subr.bf16.mxu0 0
      %996 = vmatpush2.bf16.msra.mxu0 0
      %997 = vmatprep.subr.bf16.mxu0 0
      %998 = vmatpush2.bf16.msra.mxu0 0
      %999 = vmatprep.subr.bf16.mxu0 0
      %1000 = vmatpush2.bf16.msra.mxu0 0
      %1001 = vmatprep.subr.bf16.mxu0 0
      %1002 = vmatpush2.bf16.msra.mxu0 0
      %1003 = vmatprep.subr.bf16.mxu0 0
      %1004 = vmatpush2.bf16.msra.mxu0 0
      %1005 = vmatprep.subr.bf16.mxu0 0
      %1006 = vmatpush2.bf16.msra.mxu0 0
      %1007 = vmatprep.subr.bf16.mxu0 0
      %1008 = vmatpush2.bf16.msra.mxu0 0
      %1009 = vmatprep.subr.bf16.mxu0 0
      %1010 = vmatpush2.bf16.msra.mxu0 0
      %1011 = vmatprep.mubr.bf16.mxu0 0
      %1012 = vmatmul.mubr.bf16.gmra.mxu0 %v974
      %v1013 = vpop.f32.mrf.mxu0
      %v1014 = vadd.f32 0.0, %v1013
      %v1015 = vpop.f32.mrf.mxu0
      %v1016 = vpop.f32.mrf.mxu0
      %v1017 = vpop.f32.mrf.mxu0
      %1018 = vdwg.mxu0
      %v1019 = vadd.f32 %v857, %v1014
      %1020 = vrot.lane.b32.xlu0 %v542, 104
      %v1021 = vpop.permute.xlu0 %1020
      %1022 = vrot.lane.b32.xlu0 %v543, 104
      %v1023 = vpop.permute.xlu0 %1022
      %v1025 = vsel %vm548, %v1021, 0
      %v1028 = vsel %vm548, %v1023, 0
      %1030 = vmatprep.subr.bf16.mxu0 0
      %1031 = vmatpush1.bf16.xpose.msra.mxu0 0
      %1032 = vmatprep.subr.bf16.mxu0 0
      %1033 = vmatpush1.bf16.xpose.msra.mxu0 0
      %1034 = vmatprep.subr.bf16.mxu0 0
      %1035 = vmatpush1.bf16.xpose.msra.mxu0 0
      %1036 = vmatprep.subr.bf16.mxu0 0
      %1037 = vmatpush1.bf16.xpose.msra.mxu0 0
      %1038 = vmatprep.subr.bf16.mxu0 0
      %1039 = vmatpush1.bf16.xpose.msra.mxu0 0
      %1040 = vmatprep.subr.bf16.mxu0 0
      %1041 = vmatpush1.bf16.xpose.msra.mxu0 0
      %1042 = vmatprep.subr.bf16.mxu0 0
      %1043 = vmatpush1.bf16.xpose.msra.mxu0 0
      %1044 = vmatprep.subr.bf16.mxu0 0
      %1045 = vmatpush1.bf16.xpose.msra.mxu0 %v1028
      %1046 = vmatprep.subr.bf16.mxu0 0
      %1047 = vmatpush2.bf16.xpose.msra.mxu0 0
      %1048 = vmatprep.subr.bf16.mxu0 0
      %1049 = vmatpush2.bf16.xpose.msra.mxu0 0
      %1050 = vmatprep.subr.bf16.mxu0 0
      %1051 = vmatpush2.bf16.xpose.msra.mxu0 0
      %1052 = vmatprep.subr.bf16.mxu0 0
      %1053 = vmatpush2.bf16.xpose.msra.mxu0 0
      %1054 = vmatprep.subr.bf16.mxu0 0
      %1055 = vmatpush2.bf16.xpose.msra.mxu0 0
      %1056 = vmatprep.subr.bf16.mxu0 0
      %1057 = vmatpush2.bf16.xpose.msra.mxu0 0
      %1058 = vmatprep.subr.bf16.mxu0 0
      %1059 = vmatpush2.bf16.xpose.msra.mxu0 0
      %1060 = vmatprep.subr.bf16.mxu0 0
      %1061 = vmatpush2.bf16.xpose.msra.mxu0 0
      %1062 = vmatprep.mubr.bf16.mxu0 0
      %1063 = vmatmul.mubr.bf16.gmra.mxu0 %v1025
      %v1064 = vpop.f32.mrf.mxu0
      %v1065 = vadd.f32 0.0, %v1064
      %v1066 = vpop.f32.mrf.mxu0
      %v1067 = vpop.f32.mrf.mxu0
      %v1068 = vpop.f32.mrf.mxu0
      %1069 = vdwg.mxu0
      %v1070 = vsel %vm548, %v1065, -inf
      %1071 = vmax.xlane.f32.xlu0 %v1070
      %v1072 = vpop.xlane.xlu0 %1071
      %v1073 = vsub.f32 %v1065, %v1072
      %v1074 = vmul.f32 %v1073, 1.442695
      %v1075 = vpow.pop %v1074
      %v1076 = vsel %vm548, %v1075, 0.0
      %1077 = vadd.xlane.f32.xlu0 %v1076
      %v1078 = vpop.xlane.xlu0 %1077
      %v1079 = vrcp.pop %v1078
      %v1080 = vmul.f32 %v1075, %v1079
      %v1081 = vpack.c.bf16 %v1080, %v1080
      %1082 = vrot.lane.b32.xlu0 %v543, 72
      %v1083 = vpop.permute.xlu0 %1082
      %v1085 = vsel %vm548, %v1081, 0
      %v1088 = vsel %vm613, %v1083, 0
      %1090 = vmatprep.subr.bf16.mxu0 0
      %1091 = vmatpush1.bf16.msra.mxu0 0
      %1092 = vmatprep.subr.bf16.mxu0 0
      %1093 = vmatpush1.bf16.msra.mxu0 0
      %1094 = vmatprep.subr.bf16.mxu0 0
      %1095 = vmatpush1.bf16.msra.mxu0 0
      %1096 = vmatprep.subr.bf16.mxu0 0
      %1097 = vmatpush1.bf16.msra.mxu0 0
      %1098 = vmatprep.subr.bf16.mxu0 0
      %1099 = vmatpush1.bf16.msra.mxu0 0
      %1100 = vmatprep.subr.bf16.mxu0 0
      %1101 = vmatpush1.bf16.msra.mxu0 0
      %1102 = vmatprep.subr.bf16.mxu0 0
      %1103 = vmatpush1.bf16.msra.mxu0 0
      %1104 = vmatprep.subr.bf16.mxu0 0
      %1105 = vmatpush1.bf16.msra.mxu0 %v1088
      %1106 = vmatprep.subr.bf16.mxu0 0
      %1107 = vmatpush2.bf16.msra.mxu0 0
      %1108 = vmatprep.subr.bf16.mxu0 0
      %1109 = vmatpush2.bf16.msra.mxu0 0
      %1110 = vmatprep.subr.bf16.mxu0 0
      %1111 = vmatpush2.bf16.msra.mxu0 0
      %1112 = vmatprep.subr.bf16.mxu0 0
      %1113 = vmatpush2.bf16.msra.mxu0 0
      %1114 = vmatprep.subr.bf16.mxu0 0
      %1115 = vmatpush2.bf16.msra.mxu0 0
      %1116 = vmatprep.subr.bf16.mxu0 0
      %1117 = vmatpush2.bf16.msra.mxu0 0
      %1118 = vmatprep.subr.bf16.mxu0 0
      %1119 = vmatpush2.bf16.msra.mxu0 0
      %1120 = vmatprep.subr.bf16.mxu0 0
      %1121 = vmatpush2.bf16.msra.mxu0 0
      %1122 = vmatprep.mubr.bf16.mxu0 0
      %1123 = vmatmul.mubr.bf16.gmra.mxu0 %v1085
      %v1124 = vpop.f32.mrf.mxu0
      %v1125 = vadd.f32 0.0, %v1124
      %v1126 = vpop.f32.mrf.mxu0
      %v1127 = vpop.f32.mrf.mxu0
      %v1128 = vpop.f32.mrf.mxu0
      %1129 = vdwg.mxu0
      %v1130 = vpack.c.bf16 %v1125, %v1125
      %v1132 = vsel %vm548, %v1130, 0
      %v1135 = vsel %vm613, %v547, 0
      %1137 = vmatprep.subr.bf16.mxu0 0
      %1138 = vmatpush1.bf16.msra.mxu0 0
      %1139 = vmatprep.subr.bf16.mxu0 0
      %1140 = vmatpush1.bf16.msra.mxu0 0
      %1141 = vmatprep.subr.bf16.mxu0 0
      %1142 = vmatpush1.bf16.msra.mxu0 0
      %1143 = vmatprep.subr.bf16.mxu0 0
      %1144 = vmatpush1.bf16.msra.mxu0 0
      %1145 = vmatprep.subr.bf16.mxu0 0
      %1146 = vmatpush1.bf16.msra.mxu0 0
      %1147 = vmatprep.subr.bf16.mxu0 0
      %1148 = vmatpush1.bf16.msra.mxu0 0
      %1149 = vmatprep.subr.bf16.mxu0 0
      %1150 = vmatpush1.bf16.msra.mxu0 0
      %1151 = vmatprep.subr.bf16.mxu0 0
      %1152 = vmatpush1.bf16.msra.mxu0 %v1135
      %1153 = vmatprep.subr.bf16.mxu0 0
      %1154 = vmatpush2.bf16.msra.mxu0 0
      %1155 = vmatprep.subr.bf16.mxu0 0
      %1156 = vmatpush2.bf16.msra.mxu0 0
      %1157 = vmatprep.subr.bf16.mxu0 0
      %1158 = vmatpush2.bf16.msra.mxu0 0
      %1159 = vmatprep.subr.bf16.mxu0 0
      %1160 = vmatpush2.bf16.msra.mxu0 0
      %1161 = vmatprep.subr.bf16.mxu0 0
      %1162 = vmatpush2.bf16.msra.mxu0 0
      %1163 = vmatprep.subr.bf16.mxu0 0
      %1164 = vmatpush2.bf16.msra.mxu0 0
      %1165 = vmatprep.subr.bf16.mxu0 0
      %1166 = vmatpush2.bf16.msra.mxu0 0
      %1167 = vmatprep.subr.bf16.mxu0 0
      %1168 = vmatpush2.bf16.msra.mxu0 0
      %1169 = vmatprep.mubr.bf16.mxu0 0
      %1170 = vmatmul.mubr.bf16.gmra.mxu0 %v1132
      %v1171 = vpop.f32.mrf.mxu0
      %v1172 = vadd.f32 0.0, %v1171
      %v1173 = vpop.f32.mrf.mxu0
      %v1174 = vpop.f32.mrf.mxu0
      %v1175 = vpop.f32.mrf.mxu0
      %1176 = vdwg.mxu0
      %v1177 = vadd.f32 %v1019, %v1172
      %v1178 = vadd.f32 %v404, %v1177
      %v1179 = vld [vmem:[%s7] sm:$0x1]
      %v1181 = vlaneseq
      %v1182 = vshrl.u32 %v1181, 7
      %v1183 = vsub.s32 0, %v1182
      %v1184 = vrot.slane %v1179, %v1183
      %v1186 = vadd.f32 %v1178, %v1184
      %v1187 = vsel %vm430, %v1186, 0.0
      %1188 = vadd.xlane.f32.xlu0 %v1187
      %v1189 = vpop.xlane.xlu0 %1188
      %v1190 = vrcp.pop 32.0
      %v1191 = vmul.f32 %v1189, %v1190
      %v1192 = vsub.f32 %v1186, %v1191
      %v1193 = vmul.f32 %v1192, %v1192
      %v1194 = vsel %vm430, %v1193, 0.0
      %1195 = vadd.xlane.f32.xlu0 %v1194
      %v1196 = vpop.xlane.xlu0 %1195
      %v1197 = vmul.f32 %v1196, %v1190
      %v1198 = vadd.f32 %v1197, 1e-05
      %v1199 = vrsqrt.pop %v1198
      %v1200 = vmul.f32 %v1192, %v1199
      %v1201 = vld [vmem:[%s8] sm:$0x1]
      %v1203 = vlaneseq
      %v1204 = vshrl.u32 %v1203, 7
      %v1205 = vsub.s32 0, %v1204
      %v1206 = vrot.slane %v1201, %v1205
      %v1208 = vmul.f32 %v1200, %v1206
      %v1209 = vld [vmem:[%s9] sm:$0x1]
      %v1211 = vlaneseq
      %v1212 = vshrl.u32 %v1211, 7
      %v1213 = vsub.s32 0, %v1212
      %v1214 = vrot.slane %v1209, %v1213
      %v1216 = vadd.f32 %v1208, %v1214
      %1217 = vst.msk [vmem:[%s402] sm:$0xff] %vm430, %v1216
      %p1218 = scmp.lt.s32.totalorder %s25, 1
      %s1219 = scalar_select %p1218, %s25, 1
      %p1220 = scmp.lt.s32.totalorder %s26, 0
      %s1221 = scalar_select %p1220, %s26, 0
      %s1222 = sadd.s32 %s1221, %s1219
      %s1223 = smul.addr %s1222, 8
      %s1224 = scalar_lea.vmem %s10, %s1223
      // Predicated region
      $region61: #{esm_decoder_full_moe.7} parent=59 // pred_check
        %p1225 = pneg %p275
      $region62: #{esm_decoder_full_moe.7} parent=59 // pred_check_branch
        %1227 = sbr.rel (%p1225) target = $region64
      $region63: #{esm_decoder_full_moe.7} parent=59 // pred_region
        _
      $region64: #{esm_decoder_full_moe.7} parent=59 // pred_fallthru
        _
    $region60: #{esm_decoder_full_moe.7} parent=5 // pred_fallthru
      _
    %p1228 = scmp.le.s32.totalorder 2, %s16
    // Predicated region
    $region65: #{esm_decoder_full_moe.7} parent=5 // pred_check
      %p1229 = pneg %p1228
    $region66: #{esm_decoder_full_moe.7} parent=5 // pred_check_branch
      %1231 = sbr.rel (%p1229) target = $region68
    $region67: #{esm_decoder_full_moe.7} parent=5 // pred_region
      %s1232 = ssub.s32 %s16, 2
      // Predicated region
      $region69: #{esm_decoder_full_moe.7} parent=67 // pred_check
        %p1233 = pneg %p281
      $region70: #{esm_decoder_full_moe.7} parent=67 // pred_check_branch
        %1235 = sbr.rel (%p1233) target = $region72
      $region71: #{esm_decoder_full_moe.7} parent=67 // pred_region
        %p1236 = scmp.lt.s32.totalorder %s27, 1
        %s1237 = scalar_select %p1236, %s27, 1
        %p1238 = scmp.lt.s32.totalorder %s28, 0
        %s1239 = scalar_select %p1238, %s28, 0
        %s1240 = sadd.s32 %s1239, %s1237
        %s1241 = smul.addr %s1240, 8
        %s1242 = scalar_lea.vmem %s10, %s1241
      $region72: #{esm_decoder_full_moe.7} parent=67 // pred_fallthru
        _
    $region68: #{esm_decoder_full_moe.7} parent=5 // pred_fallthru
      _
  $region6: #{esm_decoder_full_moe.7} parent=0 // loop_footer
    %s20 = sadd.s32 1, %s16
  $region7: #{esm_decoder_full_moe.7} parent=0 // loop_footer_branch
    %15 = sbr.rel target = $region3
  $region8: #{esm_decoder_full_moe.7} parent=0 // loop_exit
    _

</llo_original>
